<compile_context>
chip_gen: v6e
topology: v6e:2x2x1
jax: 0.10.0
libtpu: 0.0.40
codegen_flags: <defaults>
</compile_context>

<pallas_src>
import numpy as np
import jax
import jax.numpy as jnp
from jax import lax
from jax.experimental import pallas as pl
from jax.experimental.pallas import tpu as pltpu

EPS = 1e-5                      # PyTorch BatchNorm3d default eps
_VMEM_LIMIT = 48 * 1024 * 1024  # leaves headroom on v7x (64 MiB); fine on v5e/v6e


def _round_up(a, b):
    return (a + b - 1) // b * b


# --------------------------- Pallas kernels ---------------------------------

def _fused_bn_relu_1x1_kernel(x_ref, s1_ref, t1_ref, w1_ref,
                              s2_ref, t2_ref, w2_ref,
                              s3_ref, t3_ref, o_ref):
    """Fused  BN-ReLU-1x1  ->  BN-ReLU-1x1  ->  BN-ReLU   (channel math per voxel).

    Layout: channels on sublanes, spatial on lanes.
      x_ref : (1, Cin, tm) f32          o_ref : (1, Cin, tm) bf16
      s*/t* : (C, 1)  f32 folded BN scale / shift
      w1    : (Cmid, Cin) bf16          w2    : (Cin, Cmid) bf16
    """
    x = x_ref[0]                                                    # (Cin, tm) f32
    a1 = jnp.maximum(x * s1_ref[...] + t1_ref[...], 0.0)
    h1 = jnp.dot(w1_ref[...], a1.astype(jnp.bfloat16),
                 preferred_element_type=jnp.float32)                # (Cmid, tm)
    a2 = jnp.maximum(h1 * s2_ref[...] + t2_ref[...], 0.0)
    h2 = jnp.dot(w2_ref[...], a2.astype(jnp.bfloat16),
                 preferred_element_type=jnp.float32)                # (Cin, tm)
    a3 = jnp.maximum(h2 * s3_ref[...] + t3_ref[...], 0.0)
    o_ref[0] = a3.astype(o_ref.dtype)                               # lane-dense bf16 store


def _make_conv3x3x3_kernel(D, H, W, Cin, pad):
    """3x3x3 stride-1 'SAME' conv as a single im2col matmul per batch element.

    x_ref       : (1, Cin, D*H*W)      bf16   activation volume (channel-second)
    w_ref       : (Cout, 27*Cin)       bf16   tap-major (kd,kh,kw,ci) weight matrix
    m_ref       : (27, D*H*W)          bf16   0/1 validity mask per tap ('SAME' padding)
    o_ref       : (1, Cout, D*H*W)     f32
    slab_ref    : (Cin, D*H*W + 2*pad) bf16   lane-flattened zero-padded volume
    patches_ref : (27*Cin, D*H*W)      bf16   im2col matrix
    """
    HW = H * W
    DHW = D * HW

    def kernel(x_ref, w_ref, m_ref, o_ref, slab_ref, patches_ref):
        # Build the zero-padded, lane-flattened activation slab (aligned stores;
        # pad strips re-zeroed every step so megacore grid splitting stays safe).
        slab_ref[:, 0:pad] = jnp.zeros((Cin, pad), slab_ref.dtype)
        slab_ref[:, pad + DHW:2 * pad + DHW] = jnp.zeros((Cin, pad), slab_ref.dtype)
        slab_ref[:, pad:pad + DHW] = x_ref[0]

        masks = m_ref[...]                                          # (27, DHW) bf16
        # im2col: every tap is a static lane-offset window of the slab, masked
        # at the D/H/W borders.  All bf16, no casts.
        for kd in range(3):
            for kh in range(3):
                for kw in range(3):
                    t = (kd * 3 + kh) * 3 + kw
                    s = (kd - 1) * HW + (kh - 1) * W + (kw - 1)
                    shifted = slab_ref[:, pad + s:pad + s + DHW]    # (Cin, DHW)
                    patches_ref[t * Cin:(t + 1) * Cin, :] = shifted * masks[t:t + 1, :]

        # One MXU matmul: (Cout, 27*Cin) @ (27*Cin, DHW) -> (Cout, DHW), f32 acc.
        o_ref[0] = jnp.dot(w_ref[...], patches_ref[...],
                           preferred_element_type=jnp.float32)

    return kernel


# --------------------------- wrapper (glue) ----------------------------------

def _fold_bn(gamma, beta, mean, var):
    scale = gamma / jnp.sqrt(var + EPS)
    shift = beta - mean * scale
    return (scale.reshape(-1, 1).astype(jnp.float32),
            shift.reshape(-1, 1).astype(jnp.float32))


def _tap_masks(D, H, W):
    """(27, D*H*W) {0,1} validity mask of every 3x3x3 tap under 'SAME' padding."""
    d = np.arange(D)[:, None, None]
    h = np.arange(H)[None, :, None]
    w = np.arange(W)[None, None, :]
    rows = []
    for kd in range(3):
        for kh in range(3):
            for kw in range(3):
                valid = ((d + kd - 1 >= 0) & (d + kd - 1 < D) &
                         (h + kh - 1 >= 0) & (h + kh - 1 < H) &
                         (w + kw - 1 >= 0) & (w + kw - 1 < W))
                rows.append(valid.reshape(-1))
    return jnp.asarray(np.stack(rows).astype(np.float32), dtype=jnp.bfloat16)


def head_conv_forward(x_ncdhw, params, *, tile_m=8192):
    N, Cin, D, H, W = x_ncdhw.shape
    Cmid = params["w1"].shape[0]
    Cout = params["w3"].shape[0]
    HW, DHW = H * W, D * H * W

    s1, t1 = _fold_bn(*params["bn1"])
    s2, t2 = _fold_bn(*params["bn2"])
    s3, t3 = _fold_bn(*params["bn3"])
    w1 = params["w1"].astype(jnp.bfloat16)                        # (Cmid, Cin)
    w2 = params["w2"].astype(jnp.bfloat16)                        # (Cin, Cmid)
    w3 = params["w3"].astype(jnp.bfloat16)                        # (Cout, 27*Cin)

    # NCDHW -> (N, Cin, D*H*W): free row-major reshape, no HBM transpose pass.
    x = x_ncdhw.reshape(N, Cin, DHW).astype(jnp.float32)

    # ---- fused blocks 1 + 2 (+ block-3 BN/ReLU): one streaming pass over x ----
    tm = min(tile_m, _round_up(DHW, 128))        # lane tile, multiple of 128
    n_m = pl.cdiv(DHW, tm)                       # OOB tail lanes are clipped on store

    a3 = pl.pallas_call(
        _fused_bn_relu_1x1_kernel,
        out_shape=jax.ShapeDtypeStruct((N, Cin, DHW), jnp.bfloat16),
        grid=(N, n_m),
        in_specs=[
            pl.BlockSpec((1, Cin, tm), lambda n, m: (n, 0, m)),
            pl.BlockSpec((Cin, 1), lambda n, m: (0, 0)),
            pl.BlockSpec((Cin, 1), lambda n, m: (0, 0)),
            pl.BlockSpec((Cmid, Cin), lambda n, m: (0, 0)),
            pl.BlockSpec((Cmid, 1), lambda n, m: (0, 0)),
            pl.BlockSpec((Cmid, 1), lambda n, m: (0, 0)),
            pl.BlockSpec((Cin, Cmid), lambda n, m: (0, 0)),
            pl.BlockSpec((Cin, 1), lambda n, m: (0, 0)),
            pl.BlockSpec((Cin, 1), lambda n, m: (0, 0)),
        ],
        out_specs=pl.BlockSpec((1, Cin, tm), lambda n, m: (n, 0, m)),
        compiler_params=pltpu.CompilerParams(
            dimension_semantics=("parallel", "parallel"),
            vmem_limit_bytes=_VMEM_LIMIT),
    )(x, s1, t1, w1, s2, t2, w2, s3, t3)

    # ---- block 3: 3x3x3 'SAME' conv, one im2col matmul per batch element ------
    pad = _round_up(HW + W + 1, 128)             # >= largest |tap shift|, lane aligned
    masks = _tap_masks(D, H, W)                  # (27, DHW) bf16
    conv_kernel = _make_conv3x3x3_kernel(D, H, W, Cin, pad)

    out = pl.pallas_call(
        conv_kernel,
        out_shape=jax.ShapeDtypeStruct((N, Cout, DHW), jnp.float32),
        grid=(N,),
        in_specs=[
            pl.BlockSpec((1, Cin, DHW), lambda n: (n, 0, 0)),
            pl.BlockSpec((Cout, 27 * Cin), lambda n: (0, 0)),
            pl.BlockSpec((27, DHW), lambda n: (0, 0)),
        ],
        out_specs=pl.BlockSpec((1, Cout, DHW), lambda n: (n, 0, 0)),
        scratch_shapes=[
            pltpu.VMEM((Cin, DHW + 2 * pad), jnp.bfloat16),        # padded slab
            pltpu.VMEM((27 * Cin, DHW), jnp.bfloat16),             # im2col patches
        ],
        compiler_params=pltpu.CompilerParams(
            dimension_semantics=("parallel",),
            vmem_limit_bytes=_VMEM_LIMIT),
    )(a3, w3, masks)

    # (N, Cout, D*H*W) is already NCDHW-ordered: free reshape, no transpose pass.
    return out.reshape(N, Cout, D, H, W)


# ----------------------- deterministic parameter init ------------------------

def init_params(key, in_channel, out_channel):
    cmid = in_channel // 4
    ks = jax.random.split(key, 15)

    def bn_params(k0, k1, k2, k3, c):
        gamma = jax.random.uniform(k0, (c,), jnp.float32, 0.5, 1.5)
        beta = jax.random.normal(k1, (c,), jnp.float32) * 0.1
        mean = jax.random.normal(k2, (c,), jnp.float32) * 0.1
        var = jax.random.uniform(k3, (c,), jnp.float32, 0.5, 1.5)
        return gamma, beta, mean, var

    bn1 = bn_params(ks[0], ks[1], ks[2], ks[3], in_channel)
    bn2 = bn_params(ks[4], ks[5], ks[6], ks[7], cmid)
    bn3 = bn_params(ks[8], ks[9], ks[10], ks[11], in_channel)

    # PyTorch-layout conv weights (O, I, kD, kH, kW), bias=False
    w1_pt = jax.random.normal(ks[12], (cmid, in_channel, 1, 1, 1), jnp.float32) * 0.2
    w2_pt = jax.random.normal(ks[13], (in_channel, cmid, 1, 1, 1), jnp.float32) * 0.2
    w3_pt = jax.random.normal(ks[14], (out_channel, in_channel, 3, 3, 3), jnp.float32) * 0.1

    return {
        "bn1": bn1, "bn2": bn2, "bn3": bn3,
        "w1_pt": w1_pt, "w2_pt": w2_pt, "w3_pt": w3_pt,
        # Kernel-side layouts (weight-on-the-left matmuls; no transposes needed
        # for the 1x1s, tap-major (kd,kh,kw,ci) columns for the 3x3x3).
        "w1": w1_pt.reshape(cmid, in_channel),                        # (Cmid, Cin)
        "w2": w2_pt.reshape(in_channel, cmid),                        # (Cin, Cmid)
        "w3": jnp.transpose(w3_pt, (0, 2, 3, 4, 1)).reshape(out_channel, 27 * in_channel),
    }


# --------------------------- pure-JAX reference ------------------------------

def reference_forward(x, p):
    def bn(h, stats):
        gamma, beta, mean, var = stats
        sh = (1, -1, 1, 1, 1)
        return ((h - mean.reshape(sh)) / jnp.sqrt(var.reshape(sh) + EPS)
                * gamma.reshape(sh) + beta.reshape(sh))

    def conv(h, w, pad):
        return lax.conv_general_dilated(
            h, w, (1, 1, 1), [(pad, pad)] * 3,
            dimension_numbers=("NCDHW", "OIDHW", "NCDHW"),
            precision=lax.Precision.HIGHEST)

    h = conv(jax.nn.relu(bn(x, p["bn1"])), p["w1_pt"], 0)
    h = conv(jax.nn.relu(bn(h, p["bn2"])), p["w2_pt"], 0)
    h = conv(jax.nn.relu(bn(h, p["bn3"])), p["w3_pt"], 1)
    return h


# ------------------------------------ main -----------------------------------

if __name__ == "__main__":
    key = jax.random.PRNGKey(0)
    k_x, k_p = jax.random.split(key)

    N, Cin, D, H, W = 2, 16, 4, 8, 8
    Cout = 8

    x = jax.random.normal(k_x, (N, Cin, D, H, W), jnp.float32)   # PyTorch NCDHW input
    params = init_params(k_p, Cin, Cout)

    fwd = jax.jit(head_conv_forward)
    out = jax.block_until_ready(fwd(x, params))
    assert out.shape == (N, Cout, D, H, W), out.shape

    ref = jax.block_until_ready(reference_forward(x, params))
    if not np.allclose(np.asarray(out), np.asarray(ref), atol=2e-2, rtol=2e-2):
        max_err = float(np.max(np.abs(np.asarray(out) - np.asarray(ref))))
        raise AssertionError(f"Pallas output mismatch vs reference, max abs err = {max_err}")

    print("KERNEL_OK")
</pallas_src>

<mosaic_0001>
module attributes {stable_mosaic.version = 11 : i64} {
  func.func @_fused_bn_relu_1x1_kernel(%arg0: i32, %arg1: i32, %arg2: memref<1x16x256xf32, #tpu.memory_space<vmem>>, %arg3: memref<16x1xf32, #tpu.memory_space<vmem>>, %arg4: memref<16x1xf32, #tpu.memory_space<vmem>>, %arg5: memref<4x16xbf16, #tpu.memory_space<vmem>>, %arg6: memref<4x1xf32, #tpu.memory_space<vmem>>, %arg7: memref<4x1xf32, #tpu.memory_space<vmem>>, %arg8: memref<16x4xbf16, #tpu.memory_space<vmem>>, %arg9: memref<16x1xf32, #tpu.memory_space<vmem>>, %arg10: memref<16x1xf32, #tpu.memory_space<vmem>>, %arg11: memref<1x16x256xbf16, #tpu.memory_space<vmem>>) attributes {dimension_semantics = [#tpu.dimension_semantics<parallel>, #tpu.dimension_semantics<parallel>], iteration_bounds = array<i64: 2, 1>, scalar_prefetch = 0 : i64, scratch_operands = 0 : i64, tpu.core_type = #tpu.core_type<tc>, window_params = [{transform_indices = @transform_0, window_bounds = array<i64: 1, 16, 256>}, {pipeline_mode = #tpu.pipeline_mode<synchronous>, transform_indices = @transform_1, window_bounds = array<i64: 16, 1>}, {pipeline_mode = #tpu.pipeline_mode<synchronous>, transform_indices = @transform_2, window_bounds = array<i64: 16, 1>}, {pipeline_mode = #tpu.pipeline_mode<synchronous>, transform_indices = @transform_3, window_bounds = array<i64: 4, 16>}, {pipeline_mode = #tpu.pipeline_mode<synchronous>, transform_indices = @transform_4, window_bounds = array<i64: 4, 1>}, {pipeline_mode = #tpu.pipeline_mode<synchronous>, transform_indices = @transform_5, window_bounds = array<i64: 4, 1>}, {pipeline_mode = #tpu.pipeline_mode<synchronous>, transform_indices = @transform_6, window_bounds = array<i64: 16, 4>}, {pipeline_mode = #tpu.pipeline_mode<synchronous>, transform_indices = @transform_7, window_bounds = array<i64: 16, 1>}, {pipeline_mode = #tpu.pipeline_mode<synchronous>, transform_indices = @transform_8, window_bounds = array<i64: 16, 1>}, {transform_indices = @transform_9, window_bounds = array<i64: 1, 16, 256>}]} {
    %c0 = arith.constant 0 : index
    %c0_0 = arith.constant 0 : index
    %c0_1 = arith.constant 0 : index
    %0 = vector.load %arg2[%c0, %c0_0, %c0_1] : memref<1x16x256xf32, #tpu.memory_space<vmem>>, vector<1x16x256xf32>
    %1 = vector.shape_cast %0 : vector<1x16x256xf32> to vector<16x256xf32>
    %c0_2 = arith.constant 0 : index
    %c0_3 = arith.constant 0 : index
    %2 = vector.load %arg3[%c0_2, %c0_3] : memref<16x1xf32, #tpu.memory_space<vmem>>, vector<16x1xf32>
    %3 = vector.broadcast %2 : vector<16x1xf32> to vector<16x256xf32>
    %4 = arith.mulf %1, %3 : vector<16x256xf32>
    %c0_4 = arith.constant 0 : index
    %c0_5 = arith.constant 0 : index
    %5 = vector.load %arg4[%c0_4, %c0_5] : memref<16x1xf32, #tpu.memory_space<vmem>>, vector<16x1xf32>
    %6 = vector.broadcast %5 : vector<16x1xf32> to vector<16x256xf32>
    %7 = arith.addf %4, %6 : vector<16x256xf32>
    %cst = arith.constant 0.000000e+00 : f32
    %8 = vector.broadcast %cst : f32 to vector<16x256xf32>
    %9 = arith.maximumf %7, %8 : vector<16x256xf32>
    %c0_6 = arith.constant 0 : index
    %c0_7 = arith.constant 0 : index
    %10 = vector.load %arg5[%c0_6, %c0_7] : memref<4x16xbf16, #tpu.memory_space<vmem>>, vector<4x16xbf16>
    %11 = arith.truncf %9 : vector<16x256xf32> to vector<16x256xbf16>
    %cst_8 = arith.constant dense<0.000000e+00> : vector<4x256xf32>
    %12 = tpu.matmul %10, %11, %cst_8 {dimension_numbers = #tpu.dot_dimension_numbers<[1], [0], [0], [1], [0, 0, 1, 1], [], []>} : vector<4x16xbf16>, vector<16x256xbf16>, vector<4x256xf32> -> vector<4x256xf32>
    %c0_9 = arith.constant 0 : index
    %c0_10 = arith.constant 0 : index
    %13 = vector.load %arg6[%c0_9, %c0_10] : memref<4x1xf32, #tpu.memory_space<vmem>>, vector<4x1xf32>
    %14 = vector.broadcast %13 : vector<4x1xf32> to vector<4x256xf32>
    %15 = arith.mulf %12, %14 : vector<4x256xf32>
    %c0_11 = arith.constant 0 : index
    %c0_12 = arith.constant 0 : index
    %16 = vector.load %arg7[%c0_11, %c0_12] : memref<4x1xf32, #tpu.memory_space<vmem>>, vector<4x1xf32>
    %17 = vector.broadcast %16 : vector<4x1xf32> to vector<4x256xf32>
    %18 = arith.addf %15, %17 : vector<4x256xf32>
    %cst_13 = arith.constant 0.000000e+00 : f32
    %19 = vector.broadcast %cst_13 : f32 to vector<4x256xf32>
    %20 = arith.maximumf %18, %19 : vector<4x256xf32>
    %c0_14 = arith.constant 0 : index
    %c0_15 = arith.constant 0 : index
    %21 = vector.load %arg8[%c0_14, %c0_15] : memref<16x4xbf16, #tpu.memory_space<vmem>>, vector<16x4xbf16>
    %22 = arith.truncf %20 : vector<4x256xf32> to vector<4x256xbf16>
    %cst_16 = arith.constant dense<0.000000e+00> : vector<16x256xf32>
    %23 = tpu.matmul %21, %22, %cst_16 {dimension_numbers = #tpu.dot_dimension_numbers<[1], [0], [0], [1], [0, 0, 1, 1], [], []>} : vector<16x4xbf16>, vector<4x256xbf16>, vector<16x256xf32> -> vector<16x256xf32>
    %c0_17 = arith.constant 0 : index
    %c0_18 = arith.constant 0 : index
    %24 = vector.load %arg9[%c0_17, %c0_18] : memref<16x1xf32, #tpu.memory_space<vmem>>, vector<16x1xf32>
    %25 = vector.broadcast %24 : vector<16x1xf32> to vector<16x256xf32>
    %26 = arith.mulf %23, %25 : vector<16x256xf32>
    %c0_19 = arith.constant 0 : index
    %c0_20 = arith.constant 0 : index
    %27 = vector.load %arg10[%c0_19, %c0_20] : memref<16x1xf32, #tpu.memory_space<vmem>>, vector<16x1xf32>
    %28 = vector.broadcast %27 : vector<16x1xf32> to vector<16x256xf32>
    %29 = arith.addf %26, %28 : vector<16x256xf32>
    %cst_21 = arith.constant 0.000000e+00 : f32
    %30 = vector.broadcast %cst_21 : f32 to vector<16x256xf32>
    %31 = arith.maximumf %29, %30 : vector<16x256xf32>
    %32 = arith.truncf %31 : vector<16x256xf32> to vector<16x256xbf16>
    %c0_22 = arith.constant 0 : index
    %c0_23 = arith.constant 0 : index
    %c0_24 = arith.constant 0 : index
    %33 = vector.load %arg11[%c0_22, %c0_23, %c0_24] : memref<1x16x256xbf16, #tpu.memory_space<vmem>>, vector<1x16x256xbf16>
    %34 = vector.shape_cast %33 : vector<1x16x256xbf16> to vector<16x256xbf16>
    %35 = vector.shape_cast %32 : vector<16x256xbf16> to vector<1x16x256xbf16>
    tpu.vector_store %arg11[%c0_22, %c0_23, %c0_24], %35 {strides = array<i32>} : memref<1x16x256xbf16, #tpu.memory_space<vmem>>, vector<1x16x256xbf16>,
    return
  }
  func.func @transform_0(%arg0: i32, %arg1: i32) -> (i32, i32, i32) {
    %c0_i32 = arith.constant 0 : i32
    %c0_i32_0 = arith.constant 0 : i32
    return %arg0, %c0_i32, %arg1 : i32, i32, i32
  }
  func.func @transform_1(%arg0: i32, %arg1: i32) -> (i32, i32) {
    %c0_i32 = arith.constant 0 : i32
    %c0_i32_0 = arith.constant 0 : i32
    %c0_i32_1 = arith.constant 0 : i32
    return %c0_i32, %c0_i32_0 : i32, i32
  }
  func.func @transform_2(%arg0: i32, %arg1: i32) -> (i32, i32) {
    %c0_i32 = arith.constant 0 : i32
    %c0_i32_0 = arith.constant 0 : i32
    %c0_i32_1 = arith.constant 0 : i32
    return %c0_i32, %c0_i32_0 : i32, i32
  }
  func.func @transform_3(%arg0: i32, %arg1: i32) -> (i32, i32) {
    %c0_i32 = arith.constant 0 : i32
    %c0_i32_0 = arith.constant 0 : i32
    %c0_i32_1 = arith.constant 0 : i32
    return %c0_i32, %c0_i32_0 : i32, i32
  }
  func.func @transform_4(%arg0: i32, %arg1: i32) -> (i32, i32) {
    %c0_i32 = arith.constant 0 : i32
    %c0_i32_0 = arith.constant 0 : i32
    %c0_i32_1 = arith.constant 0 : i32
    return %c0_i32, %c0_i32_0 : i32, i32
  }
  func.func @transform_5(%arg0: i32, %arg1: i32) -> (i32, i32) {
    %c0_i32 = arith.constant 0 : i32
    %c0_i32_0 = arith.constant 0 : i32
    %c0_i32_1 = arith.constant 0 : i32
    return %c0_i32, %c0_i32_0 : i32, i32
  }
  func.func @transform_6(%arg0: i32, %arg1: i32) -> (i32, i32) {
    %c0_i32 = arith.constant 0 : i32
    %c0_i32_0 = arith.constant 0 : i32
    %c0_i32_1 = arith.constant 0 : i32
    return %c0_i32, %c0_i32_0 : i32, i32
  }
  func.func @transform_7(%arg0: i32, %arg1: i32) -> (i32, i32) {
    %c0_i32 = arith.constant 0 : i32
    %c0_i32_0 = arith.constant 0 : i32
    %c0_i32_1 = arith.constant 0 : i32
    return %c0_i32, %c0_i32_0 : i32, i32
  }
  func.func @transform_8(%arg0: i32, %arg1: i32) -> (i32, i32) {
    %c0_i32 = arith.constant 0 : i32
    %c0_i32_0 = arith.constant 0 : i32
    %c0_i32_1 = arith.constant 0 : i32
    return %c0_i32, %c0_i32_0 : i32, i32
  }
  func.func @transform_9(%arg0: i32, %arg1: i32) -> (i32, i32, i32) {
    %c0_i32 = arith.constant 0 : i32
    %c0_i32_0 = arith.constant 0 : i32
    return %arg0, %c0_i32, %arg1 : i32, i32, i32
  }
}

module attributes {stable_mosaic.version = 11 : i64} {
  func.func @kernel(%arg0: i32, %arg1: memref<1x16x256xbf16, #tpu.memory_space<vmem>>, %arg2: memref<8x432xbf16, #tpu.memory_space<vmem>>, %arg3: memref<27x256xbf16, #tpu.memory_space<vmem>>, %arg4: memref<1x8x256xf32, #tpu.memory_space<vmem>>, %arg5: memref<16x512xbf16, #tpu.memory_space<vmem>>, %arg6: memref<432x256xbf16, #tpu.memory_space<vmem>>) attributes {dimension_semantics = [#tpu.dimension_semantics<parallel>], iteration_bounds = array<i64: 2>, scalar_prefetch = 0 : i64, scratch_operands = 2 : i64, tpu.core_type = #tpu.core_type<tc>, window_params = [{transform_indices = @transform_0, window_bounds = array<i64: 1, 16, 256>}, {pipeline_mode = #tpu.pipeline_mode<synchronous>, transform_indices = @transform_1, window_bounds = array<i64: 8, 432>}, {pipeline_mode = #tpu.pipeline_mode<synchronous>, transform_indices = @transform_2, window_bounds = array<i64: 27, 256>}, {transform_indices = @transform_3, window_bounds = array<i64: 1, 8, 256>}]} {
    %cst = arith.constant 0.000000e+00 : bf16
    %0 = vector.broadcast %cst : bf16 to vector<16x128xbf16>
    %c0 = arith.constant 0 : index
    %c0_0 = arith.constant 0 : index
    %1 = vector.load %arg5[%c0, %c0_0] : memref<16x512xbf16, #tpu.memory_space<vmem>>, vector<16x128xbf16>
    tpu.vector_store %arg5[%c0, %c0_0], %0 {strides = array<i32>} : memref<16x512xbf16, #tpu.memory_space<vmem>>, vector<16x128xbf16>,
    %cst_1 = arith.constant 0.000000e+00 : bf16
    %2 = vector.broadcast %cst_1 : bf16 to vector<16x128xbf16>
    %c0_2 = arith.constant 0 : index
    %c384 = arith.constant 384 : index
    %3 = vector.load %arg5[%c0_2, %c384] : memref<16x512xbf16, #tpu.memory_space<vmem>>, vector<16x128xbf16>
    tpu.vector_store %arg5[%c0_2, %c384], %2 {strides = array<i32>} : memref<16x512xbf16, #tpu.memory_space<vmem>>, vector<16x128xbf16>,
    %c0_3 = arith.constant 0 : index
    %c0_4 = arith.constant 0 : index
    %c0_5 = arith.constant 0 : index
    %4 = vector.load %arg1[%c0_3, %c0_4, %c0_5] : memref<1x16x256xbf16, #tpu.memory_space<vmem>>, vector<1x16x256xbf16>
    %5 = vector.shape_cast %4 : vector<1x16x256xbf16> to vector<16x256xbf16>
    %c0_6 = arith.constant 0 : index
    %c128 = arith.constant 128 : index
    %6 = vector.load %arg5[%c0_6, %c128] : memref<16x512xbf16, #tpu.memory_space<vmem>>, vector<16x256xbf16>
    tpu.vector_store %arg5[%c0_6, %c128], %5 {strides = array<i32>} : memref<16x512xbf16, #tpu.memory_space<vmem>>, vector<16x256xbf16>,
    %c0_7 = arith.constant 0 : index
    %c0_8 = arith.constant 0 : index
    %7 = vector.load %arg3[%c0_7, %c0_8] : memref<27x256xbf16, #tpu.memory_space<vmem>>, vector<27x256xbf16>
    %c0_9 = arith.constant 0 : index
    %c55 = arith.constant 55 : index
    %8 = vector.load %arg5[%c0_9, %c55] : memref<16x512xbf16, #tpu.memory_space<vmem>>, vector<16x256xbf16>
    %9 = vector.extract_strided_slice %7 {offsets = [0, 0], sizes = [1, 256], strides = [1, 1]} : vector<27x256xbf16> to vector<1x256xbf16>
    %10 = vector.broadcast %9 : vector<1x256xbf16> to vector<16x256xbf16>
    %11 = arith.mulf %8, %10 : vector<16x256xbf16>
    %c0_10 = arith.constant 0 : index
    %c0_11 = arith.constant 0 : index
    %12 = vector.load %arg6[%c0_10, %c0_11] : memref<432x256xbf16, #tpu.memory_space<vmem>>, vector<16x256xbf16>
    tpu.vector_store %arg6[%c0_10, %c0_11], %11 {strides = array<i32>} : memref<432x256xbf16, #tpu.memory_space<vmem>>, vector<16x256xbf16>,
    %c0_12 = arith.constant 0 : index
    %c56 = arith.constant 56 : index
    %13 = vector.load %arg5[%c0_12, %c56] : memref<16x512xbf16, #tpu.memory_space<vmem>>, vector<16x256xbf16>
    %14 = vector.extract_strided_slice %7 {offsets = [1, 0], sizes = [1, 256], strides = [1, 1]} : vector<27x256xbf16> to vector<1x256xbf16>
    %15 = vector.broadcast %14 : vector<1x256xbf16> to vector<16x256xbf16>
    %16 = arith.mulf %13, %15 : vector<16x256xbf16>
    %c16 = arith.constant 16 : index
    %c0_13 = arith.constant 0 : index
    %17 = vector.load %arg6[%c16, %c0_13] : memref<432x256xbf16, #tpu.memory_space<vmem>>, vector<16x256xbf16>
    tpu.vector_store %arg6[%c16, %c0_13], %16 {strides = array<i32>} : memref<432x256xbf16, #tpu.memory_space<vmem>>, vector<16x256xbf16>,
    %c0_14 = arith.constant 0 : index
    %c57 = arith.constant 57 : index
    %18 = vector.load %arg5[%c0_14, %c57] : memref<16x512xbf16, #tpu.memory_space<vmem>>, vector<16x256xbf16>
    %19 = vector.extract_strided_slice %7 {offsets = [2, 0], sizes = [1, 256], strides = [1, 1]} : vector<27x256xbf16> to vector<1x256xbf16>
    %20 = vector.broadcast %19 : vector<1x256xbf16> to vector<16x256xbf16>
    %21 = arith.mulf %18, %20 : vector<16x256xbf16>
    %c32 = arith.constant 32 : index
    %c0_15 = arith.constant 0 : index
    %22 = vector.load %arg6[%c32, %c0_15] : memref<432x256xbf16, #tpu.memory_space<vmem>>, vector<16x256xbf16>
    tpu.vector_store %arg6[%c32, %c0_15], %21 {strides = array<i32>} : memref<432x256xbf16, #tpu.memory_space<vmem>>, vector<16x256xbf16>,
    %c0_16 = arith.constant 0 : index
    %c63 = arith.constant 63 : index
    %23 = vector.load %arg5[%c0_16, %c63] : memref<16x512xbf16, #tpu.memory_space<vmem>>, vector<16x256xbf16>
    %24 = vector.extract_strided_slice %7 {offsets = [3, 0], sizes = [1, 256], strides = [1, 1]} : vector<27x256xbf16> to vector<1x256xbf16>
    %25 = vector.broadcast %24 : vector<1x256xbf16> to vector<16x256xbf16>
    %26 = arith.mulf %23, %25 : vector<16x256xbf16>
    %c48 = arith.constant 48 : index
    %c0_17 = arith.constant 0 : index
    %27 = vector.load %arg6[%c48, %c0_17] : memref<432x256xbf16, #tpu.memory_space<vmem>>, vector<16x256xbf16>
    tpu.vector_store %arg6[%c48, %c0_17], %26 {strides = array<i32>} : memref<432x256xbf16, #tpu.memory_space<vmem>>, vector<16x256xbf16>,
    %c0_18 = arith.constant 0 : index
    %c64 = arith.constant 64 : index
    %28 = vector.load %arg5[%c0_18, %c64] : memref<16x512xbf16, #tpu.memory_space<vmem>>, vector<16x256xbf16>
    %29 = vector.extract_strided_slice %7 {offsets = [4, 0], sizes = [1, 256], strides = [1, 1]} : vector<27x256xbf16> to vector<1x256xbf16>
    %30 = vector.broadcast %29 : vector<1x256xbf16> to vector<16x256xbf16>
    %31 = arith.mulf %28, %30 : vector<16x256xbf16>
    %c64_19 = arith.constant 64 : index
    %c0_20 = arith.constant 0 : index
    %32 = vector.load %arg6[%c64_19, %c0_20] : memref<432x256xbf16, #tpu.memory_space<vmem>>, vector<16x256xbf16>
    tpu.vector_store %arg6[%c64_19, %c0_20], %31 {strides = array<i32>} : memref<432x256xbf16, #tpu.memory_space<vmem>>, vector<16x256xbf16>,
    %c0_21 = arith.constant 0 : index
    %c65 = arith.constant 65 : index
    %33 = vector.load %arg5[%c0_21, %c65] : memref<16x512xbf16, #tpu.memory_space<vmem>>, vector<16x256xbf16>
    %34 = vector.extract_strided_slice %7 {offsets = [5, 0], sizes = [1, 256], strides = [1, 1]} : vector<27x256xbf16> to vector<1x256xbf16>
    %35 = vector.broadcast %34 : vector<1x256xbf16> to vector<16x256xbf16>
    %36 = arith.mulf %33, %35 : vector<16x256xbf16>
    %c80 = arith.constant 80 : index
    %c0_22 = arith.constant 0 : index
    %37 = vector.load %arg6[%c80, %c0_22] : memref<432x256xbf16, #tpu.memory_space<vmem>>, vector<16x256xbf16>
    tpu.vector_store %arg6[%c80, %c0_22], %36 {strides = array<i32>} : memref<432x256xbf16, #tpu.memory_space<vmem>>, vector<16x256xbf16>,
    %c0_23 = arith.constant 0 : index
    %c71 = arith.constant 71 : index
    %38 = vector.load %arg5[%c0_23, %c71] : memref<16x512xbf16, #tpu.memory_space<vmem>>, vector<16x256xbf16>
    %39 = vector.extract_strided_slice %7 {offsets = [6, 0], sizes = [1, 256], strides = [1, 1]} : vector<27x256xbf16> to vector<1x256xbf16>
    %40 = vector.broadcast %39 : vector<1x256xbf16> to vector<16x256xbf16>
    %41 = arith.mulf %38, %40 : vector<16x256xbf16>
    %c96 = arith.constant 96 : index
    %c0_24 = arith.constant 0 : index
    %42 = vector.load %arg6[%c96, %c0_24] : memref<432x256xbf16, #tpu.memory_space<vmem>>, vector<16x256xbf16>
    tpu.vector_store %arg6[%c96, %c0_24], %41 {strides = array<i32>} : memref<432x256xbf16, #tpu.memory_space<vmem>>, vector<16x256xbf16>,
    %c0_25 = arith.constant 0 : index
    %c72 = arith.constant 72 : index
    %43 = vector.load %arg5[%c0_25, %c72] : memref<16x512xbf16, #tpu.memory_space<vmem>>, vector<16x256xbf16>
    %44 = vector.extract_strided_slice %7 {offsets = [7, 0], sizes = [1, 256], strides = [1, 1]} : vector<27x256xbf16> to vector<1x256xbf16>
    %45 = vector.broadcast %44 : vector<1x256xbf16> to vector<16x256xbf16>
    %46 = arith.mulf %43, %45 : vector<16x256xbf16>
    %c112 = arith.constant 112 : index
    %c0_26 = arith.constant 0 : index
    %47 = vector.load %arg6[%c112, %c0_26] : memref<432x256xbf16, #tpu.memory_space<vmem>>, vector<16x256xbf16>
    tpu.vector_store %arg6[%c112, %c0_26], %46 {strides = array<i32>} : memref<432x256xbf16, #tpu.memory_space<vmem>>, vector<16x256xbf16>,
    %c0_27 = arith.constant 0 : index
    %c73 = arith.constant 73 : index
    %48 = vector.load %arg5[%c0_27, %c73] : memref<16x512xbf16, #tpu.memory_space<vmem>>, vector<16x256xbf16>
    %49 = vector.extract_strided_slice %7 {offsets = [8, 0], sizes = [1, 256], strides = [1, 1]} : vector<27x256xbf16> to vector<1x256xbf16>
    %50 = vector.broadcast %49 : vector<1x256xbf16> to vector<16x256xbf16>
    %51 = arith.mulf %48, %50 : vector<16x256xbf16>
    %c128_28 = arith.constant 128 : index
    %c0_29 = arith.constant 0 : index
    %52 = vector.load %arg6[%c128_28, %c0_29] : memref<432x256xbf16, #tpu.memory_space<vmem>>, vector<16x256xbf16>
    tpu.vector_store %arg6[%c128_28, %c0_29], %51 {strides = array<i32>} : memref<432x256xbf16, #tpu.memory_space<vmem>>, vector<16x256xbf16>,
    %c0_30 = arith.constant 0 : index
    %c119 = arith.constant 119 : index
    %53 = vector.load %arg5[%c0_30, %c119] : memref<16x512xbf16, #tpu.memory_space<vmem>>, vector<16x256xbf16>
    %54 = vector.extract_strided_slice %7 {offsets = [9, 0], sizes = [1, 256], strides = [1, 1]} : vector<27x256xbf16> to vector<1x256xbf16>
    %55 = vector.broadcast %54 : vector<1x256xbf16> to vector<16x256xbf16>
    %56 = arith.mulf %53, %55 : vector<16x256xbf16>
    %c144 = arith.constant 144 : index
    %c0_31 = arith.constant 0 : index
    %57 = vector.load %arg6[%c144, %c0_31] : memref<432x256xbf16, #tpu.memory_space<vmem>>, vector<16x256xbf16>
    tpu.vector_store %arg6[%c144, %c0_31], %56 {strides = array<i32>} : memref<432x256xbf16, #tpu.memory_space<vmem>>, vector<16x256xbf16>,
    %c0_32 = arith.constant 0 : index
    %c120 = arith.constant 120 : index
    %58 = vector.load %arg5[%c0_32, %c120] : memref<16x512xbf16, #tpu.memory_space<vmem>>, vector<16x256xbf16>
    %59 = vector.extract_strided_slice %7 {offsets = [10, 0], sizes = [1, 256], strides = [1, 1]} : vector<27x256xbf16> to vector<1x256xbf16>
    %60 = vector.broadcast %59 : vector<1x256xbf16> to vector<16x256xbf16>
    %61 = arith.mulf %58, %60 : vector<16x256xbf16>
    %c160 = arith.constant 160 : index
    %c0_33 = arith.constant 0 : index
    %62 = vector.load %arg6[%c160, %c0_33] : memref<432x256xbf16, #tpu.memory_space<vmem>>, vector<16x256xbf16>
    tpu.vector_store %arg6[%c160, %c0_33], %61 {strides = array<i32>} : memref<432x256xbf16, #tpu.memory_space<vmem>>, vector<16x256xbf16>,
    %c0_34 = arith.constant 0 : index
    %c121 = arith.constant 121 : index
    %63 = vector.load %arg5[%c0_34, %c121] : memref<16x512xbf16, #tpu.memory_space<vmem>>, vector<16x256xbf16>
    %64 = vector.extract_strided_slice %7 {offsets = [11, 0], sizes = [1, 256], strides = [1, 1]} : vector<27x256xbf16> to vector<1x256xbf16>
    %65 = vector.broadcast %64 : vector<1x256xbf16> to vector<16x256xbf16>
    %66 = arith.mulf %63, %65 : vector<16x256xbf16>
    %c176 = arith.constant 176 : index
    %c0_35 = arith.constant 0 : index
    %67 = vector.load %arg6[%c176, %c0_35] : memref<432x256xbf16, #tpu.memory_space<vmem>>, vector<16x256xbf16>
    tpu.vector_store %arg6[%c176, %c0_35], %66 {strides = array<i32>} : memref<432x256xbf16, #tpu.memory_space<vmem>>, vector<16x256xbf16>,
    %c0_36 = arith.constant 0 : index
    %c127 = arith.constant 127 : index
    %68 = vector.load %arg5[%c0_36, %c127] : memref<16x512xbf16, #tpu.memory_space<vmem>>, vector<16x256xbf16>
    %69 = vector.extract_strided_slice %7 {offsets = [12, 0], sizes = [1, 256], strides = [1, 1]} : vector<27x256xbf16> to vector<1x256xbf16>
    %70 = vector.broadcast %69 : vector<1x256xbf16> to vector<16x256xbf16>
    %71 = arith.mulf %68, %70 : vector<16x256xbf16>
    %c192 = arith.constant 192 : index
    %c0_37 = arith.constant 0 : index
    %72 = vector.load %arg6[%c192, %c0_37] : memref<432x256xbf16, #tpu.memory_space<vmem>>, vector<16x256xbf16>
    tpu.vector_store %arg6[%c192, %c0_37], %71 {strides = array<i32>} : memref<432x256xbf16, #tpu.memory_space<vmem>>, vector<16x256xbf16>,
    %c0_38 = arith.constant 0 : index
    %c128_39 = arith.constant 128 : index
    %73 = vector.load %arg5[%c0_38, %c128_39] : memref<16x512xbf16, #tpu.memory_space<vmem>>, vector<16x256xbf16>
    %74 = vector.extract_strided_slice %7 {offsets = [13, 0], sizes = [1, 256], strides = [1, 1]} : vector<27x256xbf16> to vector<1x256xbf16>
    %75 = vector.broadcast %74 : vector<1x256xbf16> to vector<16x256xbf16>
    %76 = arith.mulf %73, %75 : vector<16x256xbf16>
    %c208 = arith.constant 208 : index
    %c0_40 = arith.constant 0 : index
    %77 = vector.load %arg6[%c208, %c0_40] : memref<432x256xbf16, #tpu.memory_space<vmem>>, vector<16x256xbf16>
    tpu.vector_store %arg6[%c208, %c0_40], %76 {strides = array<i32>} : memref<432x256xbf16, #tpu.memory_space<vmem>>, vector<16x256xbf16>,
    %c0_41 = arith.constant 0 : index
    %c129 = arith.constant 129 : index
    %78 = vector.load %arg5[%c0_41, %c129] : memref<16x512xbf16, #tpu.memory_space<vmem>>, vector<16x256xbf16>
    %79 = vector.extract_strided_slice %7 {offsets = [14, 0], sizes = [1, 256], strides = [1, 1]} : vector<27x256xbf16> to vector<1x256xbf16>
    %80 = vector.broadcast %79 : vector<1x256xbf16> to vector<16x256xbf16>
    %81 = arith.mulf %78, %80 : vector<16x256xbf16>
    %c224 = arith.constant 224 : index
    %c0_42 = arith.constant 0 : index
    %82 = vector.load %arg6[%c224, %c0_42] : memref<432x256xbf16, #tpu.memory_space<vmem>>, vector<16x256xbf16>
    tpu.vector_store %arg6[%c224, %c0_42], %81 {strides = array<i32>} : memref<432x256xbf16, #tpu.memory_space<vmem>>, vector<16x256xbf16>,
    %c0_43 = arith.constant 0 : index
    %c135 = arith.constant 135 : index
    %83 = vector.load %arg5[%c0_43, %c135] : memref<16x512xbf16, #tpu.memory_space<vmem>>, vector<16x256xbf16>
    %84 = vector.extract_strided_slice %7 {offsets = [15, 0], sizes = [1, 256], strides = [1, 1]} : vector<27x256xbf16> to vector<1x256xbf16>
    %85 = vector.broadcast %84 : vector<1x256xbf16> to vector<16x256xbf16>
    %86 = arith.mulf %83, %85 : vector<16x256xbf16>
    %c240 = arith.constant 240 : index
    %c0_44 = arith.constant 0 : index
    %87 = vector.load %arg6[%c240, %c0_44] : memref<432x256xbf16, #tpu.memory_space<vmem>>, vector<16x256xbf16>
    tpu.vector_store %arg6[%c240, %c0_44], %86 {strides = array<i32>} : memref<432x256xbf16, #tpu.memory_space<vmem>>, vector<16x256xbf16>,
    %c0_45 = arith.constant 0 : index
    %c136 = arith.constant 136 : index
    %88 = vector.load %arg5[%c0_45, %c136] : memref<16x512xbf16, #tpu.memory_space<vmem>>, vector<16x256xbf16>
    %89 = vector.extract_strided_slice %7 {offsets = [16, 0], sizes = [1, 256], strides = [1, 1]} : vector<27x256xbf16> to vector<1x256xbf16>
    %90 = vector.broadcast %89 : vector<1x256xbf16> to vector<16x256xbf16>
    %91 = arith.mulf %88, %90 : vector<16x256xbf16>
    %c256 = arith.constant 256 : index
    %c0_46 = arith.constant 0 : index
    %92 = vector.load %arg6[%c256, %c0_46] : memref<432x256xbf16, #tpu.memory_space<vmem>>, vector<16x256xbf16>
    tpu.vector_store %arg6[%c256, %c0_46], %91 {strides = array<i32>} : memref<432x256xbf16, #tpu.memory_space<vmem>>, vector<16x256xbf16>,
    %c0_47 = arith.constant 0 : index
    %c137 = arith.constant 137 : index
    %93 = vector.load %arg5[%c0_47, %c137] : memref<16x512xbf16, #tpu.memory_space<vmem>>, vector<16x256xbf16>
    %94 = vector.extract_strided_slice %7 {offsets = [17, 0], sizes = [1, 256], strides = [1, 1]} : vector<27x256xbf16> to vector<1x256xbf16>
    %95 = vector.broadcast %94 : vector<1x256xbf16> to vector<16x256xbf16>
    %96 = arith.mulf %93, %95 : vector<16x256xbf16>
    %c272 = arith.constant 272 : index
    %c0_48 = arith.constant 0 : index
    %97 = vector.load %arg6[%c272, %c0_48] : memref<432x256xbf16, #tpu.memory_space<vmem>>, vector<16x256xbf16>
    tpu.vector_store %arg6[%c272, %c0_48], %96 {strides = array<i32>} : memref<432x256xbf16, #tpu.memory_space<vmem>>, vector<16x256xbf16>,
    %c0_49 = arith.constant 0 : index
    %c183 = arith.constant 183 : index
    %98 = vector.load %arg5[%c0_49, %c183] : memref<16x512xbf16, #tpu.memory_space<vmem>>, vector<16x256xbf16>
    %99 = vector.extract_strided_slice %7 {offsets = [18, 0], sizes = [1, 256], strides = [1, 1]} : vector<27x256xbf16> to vector<1x256xbf16>
    %100 = vector.broadcast %99 : vector<1x256xbf16> to vector<16x256xbf16>
    %101 = arith.mulf %98, %100 : vector<16x256xbf16>
    %c288 = arith.constant 288 : index
    %c0_50 = arith.constant 0 : index
    %102 = vector.load %arg6[%c288, %c0_50] : memref<432x256xbf16, #tpu.memory_space<vmem>>, vector<16x256xbf16>
    tpu.vector_store %arg6[%c288, %c0_50], %101 {strides = array<i32>} : memref<432x256xbf16, #tpu.memory_space<vmem>>, vector<16x256xbf16>,
    %c0_51 = arith.constant 0 : index
    %c184 = arith.constant 184 : index
    %103 = vector.load %arg5[%c0_51, %c184] : memref<16x512xbf16, #tpu.memory_space<vmem>>, vector<16x256xbf16>
    %104 = vector.extract_strided_slice %7 {offsets = [19, 0], sizes = [1, 256], strides = [1, 1]} : vector<27x256xbf16> to vector<1x256xbf16>
    %105 = vector.broadcast %104 : vector<1x256xbf16> to vector<16x256xbf16>
    %106 = arith.mulf %103, %105 : vector<16x256xbf16>
    %c304 = arith.constant 304 : index
    %c0_52 = arith.constant 0 : index
    %107 = vector.load %arg6[%c304, %c0_52] : memref<432x256xbf16, #tpu.memory_space<vmem>>, vector<16x256xbf16>
    tpu.vector_store %arg6[%c304, %c0_52], %106 {strides = array<i32>} : memref<432x256xbf16, #tpu.memory_space<vmem>>, vector<16x256xbf16>,
    %c0_53 = arith.constant 0 : index
    %c185 = arith.constant 185 : index
    %108 = vector.load %arg5[%c0_53, %c185] : memref<16x512xbf16, #tpu.memory_space<vmem>>, vector<16x256xbf16>
    %109 = vector.extract_strided_slice %7 {offsets = [20, 0], sizes = [1, 256], strides = [1, 1]} : vector<27x256xbf16> to vector<1x256xbf16>
    %110 = vector.broadcast %109 : vector<1x256xbf16> to vector<16x256xbf16>
    %111 = arith.mulf %108, %110 : vector<16x256xbf16>
    %c320 = arith.constant 320 : index
    %c0_54 = arith.constant 0 : index
    %112 = vector.load %arg6[%c320, %c0_54] : memref<432x256xbf16, #tpu.memory_space<vmem>>, vector<16x256xbf16>
    tpu.vector_store %arg6[%c320, %c0_54], %111 {strides = array<i32>} : memref<432x256xbf16, #tpu.memory_space<vmem>>, vector<16x256xbf16>,
    %c0_55 = arith.constant 0 : index
    %c191 = arith.constant 191 : index
    %113 = vector.load %arg5[%c0_55, %c191] : memref<16x512xbf16, #tpu.memory_space<vmem>>, vector<16x256xbf16>
    %114 = vector.extract_strided_slice %7 {offsets = [21, 0], sizes = [1, 256], strides = [1, 1]} : vector<27x256xbf16> to vector<1x256xbf16>
    %115 = vector.broadcast %114 : vector<1x256xbf16> to vector<16x256xbf16>
    %116 = arith.mulf %113, %115 : vector<16x256xbf16>
    %c336 = arith.constant 336 : index
    %c0_56 = arith.constant 0 : index
    %117 = vector.load %arg6[%c336, %c0_56] : memref<432x256xbf16, #tpu.memory_space<vmem>>, vector<16x256xbf16>
    tpu.vector_store %arg6[%c336, %c0_56], %116 {strides = array<i32>} : memref<432x256xbf16, #tpu.memory_space<vmem>>, vector<16x256xbf16>,
    %c0_57 = arith.constant 0 : index
    %c192_58 = arith.constant 192 : index
    %118 = vector.load %arg5[%c0_57, %c192_58] : memref<16x512xbf16, #tpu.memory_space<vmem>>, vector<16x256xbf16>
    %119 = vector.extract_strided_slice %7 {offsets = [22, 0], sizes = [1, 256], strides = [1, 1]} : vector<27x256xbf16> to vector<1x256xbf16>
    %120 = vector.broadcast %119 : vector<1x256xbf16> to vector<16x256xbf16>
    %121 = arith.mulf %118, %120 : vector<16x256xbf16>
    %c352 = arith.constant 352 : index
    %c0_59 = arith.constant 0 : index
    %122 = vector.load %arg6[%c352, %c0_59] : memref<432x256xbf16, #tpu.memory_space<vmem>>, vector<16x256xbf16>
    tpu.vector_store %arg6[%c352, %c0_59], %121 {strides = array<i32>} : memref<432x256xbf16, #tpu.memory_space<vmem>>, vector<16x256xbf16>,
    %c0_60 = arith.constant 0 : index
    %c193 = arith.constant 193 : index
    %123 = vector.load %arg5[%c0_60, %c193] : memref<16x512xbf16, #tpu.memory_space<vmem>>, vector<16x256xbf16>
    %124 = vector.extract_strided_slice %7 {offsets = [23, 0], sizes = [1, 256], strides = [1, 1]} : vector<27x256xbf16> to vector<1x256xbf16>
    %125 = vector.broadcast %124 : vector<1x256xbf16> to vector<16x256xbf16>
    %126 = arith.mulf %123, %125 : vector<16x256xbf16>
    %c368 = arith.constant 368 : index
    %c0_61 = arith.constant 0 : index
    %127 = vector.load %arg6[%c368, %c0_61] : memref<432x256xbf16, #tpu.memory_space<vmem>>, vector<16x256xbf16>
    tpu.vector_store %arg6[%c368, %c0_61], %126 {strides = array<i32>} : memref<432x256xbf16, #tpu.memory_space<vmem>>, vector<16x256xbf16>,
    %c0_62 = arith.constant 0 : index
    %c199 = arith.constant 199 : index
    %128 = vector.load %arg5[%c0_62, %c199] : memref<16x512xbf16, #tpu.memory_space<vmem>>, vector<16x256xbf16>
    %129 = vector.extract_strided_slice %7 {offsets = [24, 0], sizes = [1, 256], strides = [1, 1]} : vector<27x256xbf16> to vector<1x256xbf16>
    %130 = vector.broadcast %129 : vector<1x256xbf16> to vector<16x256xbf16>
    %131 = arith.mulf %128, %130 : vector<16x256xbf16>
    %c384_63 = arith.constant 384 : index
    %c0_64 = arith.constant 0 : index
    %132 = vector.load %arg6[%c384_63, %c0_64] : memref<432x256xbf16, #tpu.memory_space<vmem>>, vector<16x256xbf16>
    tpu.vector_store %arg6[%c384_63, %c0_64], %131 {strides = array<i32>} : memref<432x256xbf16, #tpu.memory_space<vmem>>, vector<16x256xbf16>,
    %c0_65 = arith.constant 0 : index
    %c200 = arith.constant 200 : index
    %133 = vector.load %arg5[%c0_65, %c200] : memref<16x512xbf16, #tpu.memory_space<vmem>>, vector<16x256xbf16>
    %134 = vector.extract_strided_slice %7 {offsets = [25, 0], sizes = [1, 256], strides = [1, 1]} : vector<27x256xbf16> to vector<1x256xbf16>
    %135 = vector.broadcast %134 : vector<1x256xbf16> to vector<16x256xbf16>
    %136 = arith.mulf %133, %135 : vector<16x256xbf16>
    %c400 = arith.constant 400 : index
    %c0_66 = arith.constant 0 : index
    %137 = vector.load %arg6[%c400, %c0_66] : memref<432x256xbf16, #tpu.memory_space<vmem>>, vector<16x256xbf16>
    tpu.vector_store %arg6[%c400, %c0_66], %136 {strides = array<i32>} : memref<432x256xbf16, #tpu.memory_space<vmem>>, vector<16x256xbf16>,
    %c0_67 = arith.constant 0 : index
    %c201 = arith.constant 201 : index
    %138 = vector.load %arg5[%c0_67, %c201] : memref<16x512xbf16, #tpu.memory_space<vmem>>, vector<16x256xbf16>
    %139 = vector.extract_strided_slice %7 {offsets = [26, 0], sizes = [1, 256], strides = [1, 1]} : vector<27x256xbf16> to vector<1x256xbf16>
    %140 = vector.broadcast %139 : vector<1x256xbf16> to vector<16x256xbf16>
    %141 = arith.mulf %138, %140 : vector<16x256xbf16>
    %c416 = arith.constant 416 : index
    %c0_68 = arith.constant 0 : index
    %142 = vector.load %arg6[%c416, %c0_68] : memref<432x256xbf16, #tpu.memory_space<vmem>>, vector<16x256xbf16>
    tpu.vector_store %arg6[%c416, %c0_68], %141 {strides = array<i32>} : memref<432x256xbf16, #tpu.memory_space<vmem>>, vector<16x256xbf16>,
    %c0_69 = arith.constant 0 : index
    %c0_70 = arith.constant 0 : index
    %143 = vector.load %arg2[%c0_69, %c0_70] : memref<8x432xbf16, #tpu.memory_space<vmem>>, vector<8x432xbf16>
    %c0_71 = arith.constant 0 : index
    %c0_72 = arith.constant 0 : index
    %144 = vector.load %arg6[%c0_71, %c0_72] : memref<432x256xbf16, #tpu.memory_space<vmem>>, vector<432x256xbf16>
    %cst_73 = arith.constant dense<0.000000e+00> : vector<8x256xf32>
    %145 = tpu.matmul %143, %144, %cst_73 {dimension_numbers = #tpu.dot_dimension_numbers<[1], [0], [0], [1], [0, 0, 1, 1], [], []>} : vector<8x432xbf16>, vector<432x256xbf16>, vector<8x256xf32> -> vector<8x256xf32>
    %c0_74 = arith.constant 0 : index
    %c0_75 = arith.constant 0 : index
    %c0_76 = arith.constant 0 : index
    %146 = vector.load %arg4[%c0_74, %c0_75, %c0_76] : memref<1x8x256xf32, #tpu.memory_space<vmem>>, vector<1x8x256xf32>
    %147 = vector.shape_cast %146 : vector<1x8x256xf32> to vector<8x256xf32>
    %148 = vector.shape_cast %145 : vector<8x256xf32> to vector<1x8x256xf32>
    tpu.vector_store %arg4[%c0_74, %c0_75, %c0_76], %148 {strides = array<i32>} : memref<1x8x256xf32, #tpu.memory_space<vmem>>, vector<1x8x256xf32>,
    return
  }
  func.func @transform_0(%arg0: i32) -> (i32, i32, i32) {
    %c0_i32 = arith.constant 0 : i32
    %c0_i32_0 = arith.constant 0 : i32
    %c0_i32_1 = arith.constant 0 : i32
    return %arg0, %c0_i32, %c0_i32_0 : i32, i32, i32
  }
  func.func @transform_1(%arg0: i32) -> (i32, i32) {
    %c0_i32 = arith.constant 0 : i32
    %c0_i32_0 = arith.constant 0 : i32
    %c0_i32_1 = arith.constant 0 : i32
    return %c0_i32, %c0_i32_0 : i32, i32
  }
  func.func @transform_2(%arg0: i32) -> (i32, i32) {
    %c0_i32 = arith.constant 0 : i32
    %c0_i32_0 = arith.constant 0 : i32
    %c0_i32_1 = arith.constant 0 : i32
    return %c0_i32, %c0_i32_0 : i32, i32
  }
  func.func @transform_3(%arg0: i32) -> (i32, i32, i32) {
    %c0_i32 = arith.constant 0 : i32
    %c0_i32_0 = arith.constant 0 : i32
    %c0_i32_1 = arith.constant 0 : i32
    return %arg0, %c0_i32, %c0_i32_0 : i32, i32, i32
  }
}

</mosaic_0001>

<llo_original>
// kernel: head_conv_forward.2
$region0: #{head_conv_forward.2}
  #allocation0 [shape = 'u32[]', space=smem, size = 0x4, offset = 0x4, fixed_abs, tag = 'smem constant byte address 0x4 - core index']
  #allocation1 [shape = 'u32[144,128]{1,0:T(1,128)}', space=vmem, size = 0x12000, scoped, tag = 'internal scratch']
  %s0 = inlined_call_operand.vmem [shape: f32[2,16,256], index: 0, kind: input, shape index: {}]
  %s1 = inlined_call_operand.vmem [shape: f32[16,1], index: 1, kind: input, shape index: {}]
  %s2 = inlined_call_operand.vmem [shape: f32[16,1], index: 2, kind: input, shape index: {}]
  %s3 = inlined_call_operand.vmem [shape: bf16[4,16], index: 3, kind: input, shape index: {}]
  %s4 = inlined_call_operand.vmem [shape: f32[4,1], index: 4, kind: input, shape index: {}]
  %s5 = inlined_call_operand.vmem [shape: f32[4,1], index: 5, kind: input, shape index: {}]
  %s6 = inlined_call_operand.vmem [shape: bf16[16,4], index: 6, kind: input, shape index: {}]
  %s7 = inlined_call_operand.vmem [shape: f32[16,1], index: 7, kind: input, shape index: {}]
  %s8 = inlined_call_operand.vmem [shape: f32[16,1], index: 8, kind: input, shape index: {}]
  %s9 = inlined_call_operand.vmem [shape: bf16[2,16,256], index: 9, kind: output, shape index: {}]
  %s10 = sld [smem:[#allocation0]]
  $region69: #{head_conv_forward.2} parent=0
    _
  %s12 = ssub.s32 1, %s10
  %s13 = scalar_select 0, %s12, %s10
  loop: start=0, step=1, limit=4
  $region2: #{head_conv_forward.2} parent=0 // loop_pre_header
    _
  $region3: #{head_conv_forward.2} parent=0 // loop_header
    %s15 = sphi 0, %s19
    %p16 = scmp.ge.s32.totalorder %s15, 4
    %s22 = sphi 0, %s34
    %s23 = sphi 0, %s30
    %s24 = sphi 0, %s22
    %s25 = sphi 0, %s23
    %s26 = sphi 0, %s24
    %s27 = sphi 0, %s25
    %s39 = sphi 0, %s41
    %s42 = sphi 0, %s39
    %s43 = sphi 0, %s42
    %s59 = sphi 0, %s43
    %s63 = sphi 0, %s63
    %s65 = sphi 0, %s63
    %s66 = sphi 0, %s65
    %s80 = sphi 0, %s66
    %s84 = sphi 0, %s84
    %s86 = sphi 0, %s84
    %s87 = sphi 0, %s86
    %s101 = sphi 0, %s87
    %s105 = sphi 0, %s105
    %s107 = sphi 0, %s105
    %s108 = sphi 0, %s107
    %s122 = sphi 0, %s108
    %s126 = sphi 0, %s126
    %s128 = sphi 0, %s126
    %s129 = sphi 0, %s128
    %s143 = sphi 0, %s129
    %s147 = sphi 0, %s147
    %s149 = sphi 0, %s147
    %s150 = sphi 0, %s149
    %s164 = sphi 0, %s150
    %s168 = sphi 0, %s168
    %s170 = sphi 0, %s168
    %s171 = sphi 0, %s170
    %s185 = sphi 0, %s171
    %s189 = sphi 0, %s189
    %s191 = sphi 0, %s189
    %s192 = sphi 0, %s191
    %s206 = sphi 0, %s192
    %s210 = sphi 0, %s210
    %s212 = sphi 0, %s210
    %s213 = sphi 0, %s212
    %s227 = sphi 0, %s213
    %s235 = sphi 0, %s237
    %s238 = sphi 0, %s235
    %s239 = sphi 0, %s238
    %s255 = sphi 0, %s239
  $region4: #{head_conv_forward.2} parent=0 // loop_header_branch
    %18 = sbr.rel (%p16) target = $region8
  $region5: #{head_conv_forward.2} parent=0 // loop_body
    %s20 = ssub.s32 %s15, 1
    %s21 = ssub.s32 %s15, 2
    %s28 = sadd.s32 1, %s23
    %p29 = scmp.ge.s32.totalorder %s28, 1
    %s30 = scalar_select %p29, 0, %s28
    %s31 = sadd.s32 1, %s22
    %s32 = scalar_select %p29, %s31, %s22
    %p33 = scmp.ge.s32.totalorder %s32, 2
    %s34 = scalar_select %p33, 0, %s32
    %s35 = ssub.s32 %s22, %s34
    %s36 = ssub.s32 %s23, %s30
    %s37 = sor.u32 %s35, %s36
    %p38 = scmp.eq.s32.totalorder %s37, 0
    %s40 = sadd.s32 %s39, 1
    %s41 = scalar_select %p38, %s39, %s40
    %p44 = pneg %p38
    %p45 = scmp.eq.s32.totalorder %s15, 1
    %p46 = por %p44, %p45
    %p47 = scmp.ne.s32.totalorder %s39, %s42
    %p48 = scmp.eq.s32.totalorder %s15, 0
    %p49 = por %p47, %p48
    %p50 = scmp.ne.s32.totalorder %s39, %s42
    %p51 = scmp.eq.s32.totalorder %s20, 1
    %p52 = por %p50, %p51
    %p53 = scmp.ne.s32.totalorder %s42, %s43
    %p54 = scmp.eq.s32.totalorder %s20, 0
    %p55 = por %p53, %p54
    %p56 = scmp.ne.s32.totalorder %s42, %s43
    %p57 = scmp.eq.s32.totalorder %s21, 1
    %p58 = por %p56, %p57
    %p60 = scmp.ne.s32.totalorder %s43, %s59
    %p61 = scmp.eq.s32.totalorder %s21, 0
    %p62 = por %p60, %p61
    %s64 = sadd.s32 %s63, 1
    %p67 = scmp.eq.s32.totalorder %s15, 1
    %p68 = scmp.ne.s32.totalorder %s63, %s65
    %p69 = scmp.eq.s32.totalorder %s15, 0
    %p70 = por %p68, %p69
    %p71 = scmp.ne.s32.totalorder %s63, %s65
    %p72 = scmp.eq.s32.totalorder %s20, 1
    %p73 = por %p71, %p72
    %p74 = scmp.ne.s32.totalorder %s65, %s66
    %p75 = scmp.eq.s32.totalorder %s20, 0
    %p76 = por %p74, %p75
    %p77 = scmp.ne.s32.totalorder %s65, %s66
    %p78 = scmp.eq.s32.totalorder %s21, 1
    %p79 = por %p77, %p78
    %p81 = scmp.ne.s32.totalorder %s66, %s80
    %p82 = scmp.eq.s32.totalorder %s21, 0
    %p83 = por %p81, %p82
    %s85 = sadd.s32 %s84, 1
    %p88 = scmp.eq.s32.totalorder %s15, 1
    %p89 = scmp.ne.s32.totalorder %s84, %s86
    %p90 = scmp.eq.s32.totalorder %s15, 0
    %p91 = por %p89, %p90
    %p92 = scmp.ne.s32.totalorder %s84, %s86
    %p93 = scmp.eq.s32.totalorder %s20, 1
    %p94 = por %p92, %p93
    %p95 = scmp.ne.s32.totalorder %s86, %s87
    %p96 = scmp.eq.s32.totalorder %s20, 0
    %p97 = por %p95, %p96
    %p98 = scmp.ne.s32.totalorder %s86, %s87
    %p99 = scmp.eq.s32.totalorder %s21, 1
    %p100 = por %p98, %p99
    %p102 = scmp.ne.s32.totalorder %s87, %s101
    %p103 = scmp.eq.s32.totalorder %s21, 0
    %p104 = por %p102, %p103
    %s106 = sadd.s32 %s105, 1
    %p109 = scmp.eq.s32.totalorder %s15, 1
    %p110 = scmp.ne.s32.totalorder %s105, %s107
    %p111 = scmp.eq.s32.totalorder %s15, 0
    %p112 = por %p110, %p111
    %p113 = scmp.ne.s32.totalorder %s105, %s107
    %p114 = scmp.eq.s32.totalorder %s20, 1
    %p115 = por %p113, %p114
    %p116 = scmp.ne.s32.totalorder %s107, %s108
    %p117 = scmp.eq.s32.totalorder %s20, 0
    %p118 = por %p116, %p117
    %p119 = scmp.ne.s32.totalorder %s107, %s108
    %p120 = scmp.eq.s32.totalorder %s21, 1
    %p121 = por %p119, %p120
    %p123 = scmp.ne.s32.totalorder %s108, %s122
    %p124 = scmp.eq.s32.totalorder %s21, 0
    %p125 = por %p123, %p124
    %s127 = sadd.s32 %s126, 1
    %p130 = scmp.eq.s32.totalorder %s15, 1
    %p131 = scmp.ne.s32.totalorder %s126, %s128
    %p132 = scmp.eq.s32.totalorder %s15, 0
    %p133 = por %p131, %p132
    %p134 = scmp.ne.s32.totalorder %s126, %s128
    %p135 = scmp.eq.s32.totalorder %s20, 1
    %p136 = por %p134, %p135
    %p137 = scmp.ne.s32.totalorder %s128, %s129
    %p138 = scmp.eq.s32.totalorder %s20, 0
    %p139 = por %p137, %p138
    %p140 = scmp.ne.s32.totalorder %s128, %s129
    %p141 = scmp.eq.s32.totalorder %s21, 1
    %p142 = por %p140, %p141
    %p144 = scmp.ne.s32.totalorder %s129, %s143
    %p145 = scmp.eq.s32.totalorder %s21, 0
    %p146 = por %p144, %p145
    %s148 = sadd.s32 %s147, 1
    %p151 = scmp.eq.s32.totalorder %s15, 1
    %p152 = scmp.ne.s32.totalorder %s147, %s149
    %p153 = scmp.eq.s32.totalorder %s15, 0
    %p154 = por %p152, %p153
    %p155 = scmp.ne.s32.totalorder %s147, %s149
    %p156 = scmp.eq.s32.totalorder %s20, 1
    %p157 = por %p155, %p156
    %p158 = scmp.ne.s32.totalorder %s149, %s150
    %p159 = scmp.eq.s32.totalorder %s20, 0
    %p160 = por %p158, %p159
    %p161 = scmp.ne.s32.totalorder %s149, %s150
    %p162 = scmp.eq.s32.totalorder %s21, 1
    %p163 = por %p161, %p162
    %p165 = scmp.ne.s32.totalorder %s150, %s164
    %p166 = scmp.eq.s32.totalorder %s21, 0
    %p167 = por %p165, %p166
    %s169 = sadd.s32 %s168, 1
    %p172 = scmp.eq.s32.totalorder %s15, 1
    %p173 = scmp.ne.s32.totalorder %s168, %s170
    %p174 = scmp.eq.s32.totalorder %s15, 0
    %p175 = por %p173, %p174
    %p176 = scmp.ne.s32.totalorder %s168, %s170
    %p177 = scmp.eq.s32.totalorder %s20, 1
    %p178 = por %p176, %p177
    %p179 = scmp.ne.s32.totalorder %s170, %s171
    %p180 = scmp.eq.s32.totalorder %s20, 0
    %p181 = por %p179, %p180
    %p182 = scmp.ne.s32.totalorder %s170, %s171
    %p183 = scmp.eq.s32.totalorder %s21, 1
    %p184 = por %p182, %p183
    %p186 = scmp.ne.s32.totalorder %s171, %s185
    %p187 = scmp.eq.s32.totalorder %s21, 0
    %p188 = por %p186, %p187
    %s190 = sadd.s32 %s189, 1
    %p193 = scmp.eq.s32.totalorder %s15, 1
    %p194 = scmp.ne.s32.totalorder %s189, %s191
    %p195 = scmp.eq.s32.totalorder %s15, 0
    %p196 = por %p194, %p195
    %p197 = scmp.ne.s32.totalorder %s189, %s191
    %p198 = scmp.eq.s32.totalorder %s20, 1
    %p199 = por %p197, %p198
    %p200 = scmp.ne.s32.totalorder %s191, %s192
    %p201 = scmp.eq.s32.totalorder %s20, 0
    %p202 = por %p200, %p201
    %p203 = scmp.ne.s32.totalorder %s191, %s192
    %p204 = scmp.eq.s32.totalorder %s21, 1
    %p205 = por %p203, %p204
    %p207 = scmp.ne.s32.totalorder %s192, %s206
    %p208 = scmp.eq.s32.totalorder %s21, 0
    %p209 = por %p207, %p208
    %s211 = sadd.s32 %s210, 1
    %p214 = scmp.eq.s32.totalorder %s15, 1
    %p215 = scmp.ne.s32.totalorder %s210, %s212
    %p216 = scmp.eq.s32.totalorder %s15, 0
    %p217 = por %p215, %p216
    %p218 = scmp.ne.s32.totalorder %s210, %s212
    %p219 = scmp.eq.s32.totalorder %s20, 1
    %p220 = por %p218, %p219
    %p221 = scmp.ne.s32.totalorder %s212, %s213
    %p222 = scmp.eq.s32.totalorder %s20, 0
    %p223 = por %p221, %p222
    %p224 = scmp.ne.s32.totalorder %s212, %s213
    %p225 = scmp.eq.s32.totalorder %s21, 1
    %p226 = por %p224, %p225
    %p228 = scmp.ne.s32.totalorder %s213, %s227
    %p229 = scmp.eq.s32.totalorder %s21, 0
    %p230 = por %p228, %p229
    %s231 = ssub.s32 %s22, %s34
    %s232 = ssub.s32 %s23, %s30
    %s233 = sor.u32 %s231, %s232
    %p234 = scmp.eq.s32.totalorder %s233, 0
    %s236 = sadd.s32 %s235, 1
    %s237 = scalar_select %p234, %s235, %s236
    %p240 = pneg %p234
    %p241 = scmp.eq.s32.totalorder %s15, 1
    %p242 = por %p240, %p241
    %p243 = scmp.ne.s32.totalorder %s235, %s238
    %p244 = scmp.eq.s32.totalorder %s15, 0
    %p245 = por %p243, %p244
    %p246 = scmp.ne.s32.totalorder %s235, %s238
    %p247 = scmp.eq.s32.totalorder %s20, 1
    %p248 = por %p246, %p247
    %p249 = scmp.ne.s32.totalorder %s238, %s239
    %p250 = scmp.eq.s32.totalorder %s20, 0
    %p251 = por %p249, %p250
    %p252 = scmp.ne.s32.totalorder %s238, %s239
    %p253 = scmp.eq.s32.totalorder %s21, 1
    %p254 = por %p252, %p253
    %p256 = scmp.ne.s32.totalorder %s239, %s255
    %p257 = scmp.eq.s32.totalorder %s21, 0
    %p258 = por %p256, %p257
    %p259 = scmp.le.s32.totalorder 1, %s15
    %p260 = scmp.lt.s32.totalorder %s15, 3
    %p261 = pnand %p259, %p260
    %p262 = pneg %p261
    // Predicated region
    $region9: #{head_conv_forward.2} parent=5 // pred_check
      _
    $region10: #{head_conv_forward.2} parent=5 // pred_check_branch
      %264 = sbr.rel (%p261) target = $region12
    $region11: #{head_conv_forward.2} parent=5 // pred_region
      %s265 = ssub.s32 %s15, 1
      // Predicated region
      $region13: #{head_conv_forward.2} parent=11 // pred_check
        %p266 = pneg %p76
      $region14: #{head_conv_forward.2} parent=11 // pred_check_branch
        %268 = sbr.rel (%p266) target = $region16
      $region15: #{head_conv_forward.2} parent=11 // pred_region
        _
      $region16: #{head_conv_forward.2} parent=11 // pred_fallthru
        _
      // Predicated region
      $region17: #{head_conv_forward.2} parent=11 // pred_check
        %p269 = pneg %p97
      $region18: #{head_conv_forward.2} parent=11 // pred_check_branch
        %271 = sbr.rel (%p269) target = $region20
      $region19: #{head_conv_forward.2} parent=11 // pred_region
        _
      $region20: #{head_conv_forward.2} parent=11 // pred_fallthru
        _
      // Predicated region
      $region21: #{head_conv_forward.2} parent=11 // pred_check
        %p272 = pneg %p118
      $region22: #{head_conv_forward.2} parent=11 // pred_check_branch
        %274 = sbr.rel (%p272) target = $region24
      $region23: #{head_conv_forward.2} parent=11 // pred_region
        _
      $region24: #{head_conv_forward.2} parent=11 // pred_fallthru
        _
      // Predicated region
      $region25: #{head_conv_forward.2} parent=11 // pred_check
        %p275 = pneg %p139
      $region26: #{head_conv_forward.2} parent=11 // pred_check_branch
        %277 = sbr.rel (%p275) target = $region28
      $region27: #{head_conv_forward.2} parent=11 // pred_region
        _
      $region28: #{head_conv_forward.2} parent=11 // pred_fallthru
        _
      // Predicated region
      $region29: #{head_conv_forward.2} parent=11 // pred_check
        %p278 = pneg %p160
      $region30: #{head_conv_forward.2} parent=11 // pred_check_branch
        %280 = sbr.rel (%p278) target = $region32
      $region31: #{head_conv_forward.2} parent=11 // pred_region
        _
      $region32: #{head_conv_forward.2} parent=11 // pred_fallthru
        _
      // Predicated region
      $region33: #{head_conv_forward.2} parent=11 // pred_check
        %p281 = pneg %p181
      $region34: #{head_conv_forward.2} parent=11 // pred_check_branch
        %283 = sbr.rel (%p281) target = $region36
      $region35: #{head_conv_forward.2} parent=11 // pred_region
        _
      $region36: #{head_conv_forward.2} parent=11 // pred_fallthru
        _
      // Predicated region
      $region37: #{head_conv_forward.2} parent=11 // pred_check
        %p284 = pneg %p202
      $region38: #{head_conv_forward.2} parent=11 // pred_check_branch
        %286 = sbr.rel (%p284) target = $region40
      $region39: #{head_conv_forward.2} parent=11 // pred_region
        _
      $region40: #{head_conv_forward.2} parent=11 // pred_fallthru
        _
      // Predicated region
      $region41: #{head_conv_forward.2} parent=11 // pred_check
        %p287 = pneg %p223
      $region42: #{head_conv_forward.2} parent=11 // pred_check_branch
        %289 = sbr.rel (%p287) target = $region44
      $region43: #{head_conv_forward.2} parent=11 // pred_region
        _
      $region44: #{head_conv_forward.2} parent=11 // pred_fallthru
        _
    $region12: #{head_conv_forward.2} parent=5 // pred_fallthru
      _
    %p290 = scmp.lt.s32.totalorder %s15, 2
    // Predicated region
    $region45: #{head_conv_forward.2} parent=5 // pred_check
      %p291 = pneg %p290
    $region46: #{head_conv_forward.2} parent=5 // pred_check_branch
      %293 = sbr.rel (%p291) target = $region48
    $region47: #{head_conv_forward.2} parent=5 // pred_region
      // Predicated region
      $region49: #{head_conv_forward.2} parent=47 // pred_check
        %p294 = pneg %p49
      $region50: #{head_conv_forward.2} parent=47 // pred_check_branch
        %296 = sbr.rel (%p294) target = $region52
      $region51: #{head_conv_forward.2} parent=47 // pred_region
        %s297 = smul.u32 2, %s23
        %p298 = scmp.lt.s32.totalorder %s22, 1
        %s299 = scalar_select %p298, %s22, 1
        %p300 = scmp.lt.s32.totalorder %s297, 1
        %s301 = scalar_select %p300, %s297, 1
        %s302 = smul.addr %s299, 4
        %s303 = sadd.s32 %s301, %s302
        %s304 = smul.addr %s303, 8
        %s305 = scalar_lea.vmem %s0, %s304
        %s306 = smul.u32 2, %s23
      $region52: #{head_conv_forward.2} parent=47 // pred_fallthru
        _
    $region48: #{head_conv_forward.2} parent=5 // pred_fallthru
      _
    %p307 = scmp.le.s32.totalorder 1, %s15
    %p308 = scmp.lt.s32.totalorder %s15, 3
    %p309 = pnand %p307, %p308
    %p310 = pneg %p309
    // Predicated region
    $region53: #{head_conv_forward.2} parent=5 // pred_check
      _
    $region54: #{head_conv_forward.2} parent=5 // pred_check_branch
      %312 = sbr.rel (%p309) target = $region56
    $region55: #{head_conv_forward.2} parent=5 // pred_region
      %s313 = ssub.s32 %s15, 1
      %s314 = smul.u32 2, %s25
      %p315 = scmp.lt.s32.totalorder %s24, 1
      %s316 = scalar_select %p315, %s24, 1
      %p317 = scmp.lt.s32.totalorder %s314, 1
      %s318 = scalar_select %p317, %s314, 1
      %s319 = smul.addr %s316, 4
      %s320 = sadd.s32 %s318, %s319
      %s321 = smul.addr %s320, 8
      %s322 = scalar_lea.vmem %s0, %s321
      %p323 = pneg %p55
      %p324 = pneg %p52
      %p325 = pneg %p76
      %p326 = pneg %p73
      %p327 = pneg %p97
      %p328 = pneg %p94
      %p329 = pneg %p118
      %p330 = pneg %p115
      %p331 = pneg %p139
      %p332 = pneg %p136
      %p333 = pneg %p160
      %p334 = pneg %p157
      %p335 = pneg %p181
      %p336 = pneg %p178
      %p337 = pneg %p202
      %p338 = pneg %p199
      %p339 = pneg %p223
      %p340 = pneg %p220
      %p341 = pneg %p251
      %p342 = pneg %p248
      %s343 = smul.u32 2, %s25
      %p344 = scmp.lt.s32.totalorder %s24, 1
      %s345 = scalar_select %p344, %s24, 1
      %p346 = scmp.lt.s32.totalorder %s343, 1
      %s347 = scalar_select %p346, %s343, 1
      %s348 = smul.addr %s345, 4
      %s349 = sadd.s32 %s347, %s348
      %s350 = smul.addr %s349, 4
      %s351 = scalar_lea.vmem %s9, %s350
      %s352 = smul.u32 2, %s25
      %p353 = scmp.lt.s32.totalorder %s24, 1
      %s354 = scalar_select %p353, %s24, 1
      %p355 = scmp.lt.s32.totalorder %s352, 1
      %s356 = scalar_select %p355, %s352, 1
      %s357 = smul.addr %s354, 4
      %s358 = sadd.s32 %s356, %s357
      %s359 = smul.addr %s358, 8
      %s360 = scalar_lea.vmem %s0, %s359
      %s361 = smul.u32 2, %s25
      %s362 = smul.u32 2, %s25
      %p363 = scmp.lt.s32.totalorder %s24, 1
      %s364 = scalar_select %p363, %s24, 1
      %p365 = scmp.lt.s32.totalorder %s362, 1
      %s366 = scalar_select %p365, %s362, 1
      %s367 = smul.addr %s364, 4
      %s368 = sadd.s32 %s366, %s367
      %s369 = smul.addr %s368, 4
      %s370 = scalar_lea.vmem %s9, %s369
      %s371 = smul.u32 2, %s25
      %v373 = vld [vmem:[%s360] sm:$0xff]
      %v374 = vld [vmem:[%s360 + $0x8] sm:$0xff]
      %v375 = vld [vmem:[%s360 + $0x10] sm:$0xff]
      %v376 = vld [vmem:[%s360 + $0x18] sm:$0xff]
      %v377 = vld [vmem:[%s1] sm:$0xff]
      %v378 = vld [vmem:[%s1 + $0x8] sm:$0xff]
      %380 = vset.pattern.permute.xlu0 0
      %381 = vperm.xlu0 %380, %v377
      %v382 = vpop.permute.xlu0 %381
      %385 = vset.pattern.permute.xlu0 0
      %386 = vperm.xlu0 %385, %v378
      %v387 = vpop.permute.xlu0 %386
      %v389 = vmul.f32 %v373, %v382
      %v390 = vmul.f32 %v374, %v382
      %v391 = vmul.f32 %v375, %v387
      %v392 = vmul.f32 %v376, %v387
      %v393 = vld [vmem:[%s2] sm:$0xff]
      %v394 = vld [vmem:[%s2 + $0x8] sm:$0xff]
      %396 = vset.pattern.permute.xlu0 0
      %397 = vperm.xlu0 %396, %v393
      %v398 = vpop.permute.xlu0 %397
      %401 = vset.pattern.permute.xlu0 0
      %402 = vperm.xlu0 %401, %v394
      %v403 = vpop.permute.xlu0 %402
      %v405 = vadd.f32 %v389, %v398
      %v406 = vadd.f32 %v390, %v398
      %v407 = vadd.f32 %v391, %v403
      %v408 = vadd.f32 %v392, %v403
      %v409 = vmax.f32 %v405, 0.0
      %v410 = vmax.f32 %v406, 0.0
      %v411 = vmax.f32 %v407, 0.0
      %v412 = vmax.f32 %v408, 0.0
      %v413 = vld [vmem:[%s3] sm:$0x3]
      %v414 = vpack.c.bf16 %v411, %v409
      %v415 = vpack.c.bf16 %v412, %v410
      %vm416 = vcmask 130048
      %v418 = vsel %vm416, %v413, 0
      %420 = vmatprep.subr.bf16.mxu0 0
      %421 = vmatpush1.bf16.msra.mxu0 0
      %422 = vmatprep.subr.bf16.mxu0 0
      %423 = vmatpush1.bf16.msra.mxu0 0
      %424 = vmatprep.subr.bf16.mxu0 0
      %425 = vmatpush1.bf16.msra.mxu0 0
      %426 = vmatprep.subr.bf16.mxu0 0
      %427 = vmatpush1.bf16.msra.mxu0 0
      %428 = vmatprep.subr.bf16.mxu0 0
      %429 = vmatpush1.bf16.msra.mxu0 0
      %430 = vmatprep.subr.bf16.mxu0 0
      %431 = vmatpush1.bf16.msra.mxu0 0
      %432 = vmatprep.subr.bf16.mxu0 0
      %433 = vmatpush1.bf16.msra.mxu0 0
      %434 = vmatprep.subr.bf16.mxu0 %v415
      %435 = vmatpush1.bf16.msra.mxu0 %v414
      %436 = vmatprep.subr.bf16.mxu0 0
      %437 = vmatpush2.bf16.msra.mxu0 0
      %438 = vmatprep.subr.bf16.mxu0 0
      %439 = vmatpush2.bf16.msra.mxu0 0
      %440 = vmatprep.subr.bf16.mxu0 0
      %441 = vmatpush2.bf16.msra.mxu0 0
      %442 = vmatprep.subr.bf16.mxu0 0
      %443 = vmatpush2.bf16.msra.mxu0 0
      %444 = vmatprep.subr.bf16.mxu0 0
      %445 = vmatpush2.bf16.msra.mxu0 0
      %446 = vmatprep.subr.bf16.mxu0 0
      %447 = vmatpush2.bf16.msra.mxu0 0
      %448 = vmatprep.subr.bf16.mxu0 0
      %449 = vmatpush2.bf16.msra.mxu0 0
      %450 = vmatprep.subr.bf16.mxu0 0
      %451 = vmatpush2.bf16.msra.mxu0 0
      %452 = vmatprep.mubr.bf16.mxu0 0
      %453 = vmatmul.mubr.bf16.gmra.mxu0 %v418
      %v454 = vpop.f32.mrf.mxu0
      %v455 = vadd.f32 0.0, %v454
      %v456 = vpop.f32.mrf.mxu0
      %v457 = vadd.f32 0.0, %v456
      %v458 = vpop.f32.mrf.mxu0
      %v459 = vpop.f32.mrf.mxu0
      %460 = vdwg.mxu0
      %v461 = vld [vmem:[%s4] sm:$0xf]
      %463 = vset.pattern.permute.xlu0 0
      %464 = vperm.xlu0 %463, %v461
      %v465 = vpop.permute.xlu0 %464
      %v467 = vmul.f32 %v455, %v465
      %v468 = vmul.f32 %v457, %v465
      %v469 = vld [vmem:[%s5] sm:$0xf]
      %471 = vset.pattern.permute.xlu0 0
      %472 = vperm.xlu0 %471, %v469
      %v473 = vpop.permute.xlu0 %472
      %v475 = vadd.f32 %v467, %v473
      %v476 = vadd.f32 %v468, %v473
      %v477 = vmax.f32 %v475, 0.0
      %v478 = vmax.f32 %v476, 0.0
      %v479 = vld [vmem:[%s6] sm:$0xf]
      %v480 = vld [vmem:[%s6 + $0x4] sm:$0xf]
      %v481 = vpack.c.bf16 %v477, %v477
      %v482 = vpack.c.bf16 %v478, %v478
      %v485 = vunpack.c.l.b16 %v479
      %v486 = vunpack.c.l.b16 %v480
      %v487 = vpack.c.b16 %v486, %v485
      %vm488 = vcmask 31744
      %v490 = vsel %vm488, %v487, 0
      %vm492 = vcmask 1041408
      %v494 = vsel %vm492, %v481, 0
      %v497 = vsel %vm492, %v482, 0
      %499 = vmatprep.subr.bf16.mxu0 0
      %500 = vmatpush1.bf16.msra.mxu0 0
      %501 = vmatprep.subr.bf16.mxu0 0
      %502 = vmatpush1.bf16.msra.mxu0 0
      %503 = vmatprep.subr.bf16.mxu0 0
      %504 = vmatpush1.bf16.msra.mxu0 0
      %505 = vmatprep.subr.bf16.mxu0 0
      %506 = vmatpush1.bf16.msra.mxu0 0
      %507 = vmatprep.subr.bf16.mxu0 0
      %508 = vmatpush1.bf16.msra.mxu0 0
      %509 = vmatprep.subr.bf16.mxu0 0
      %510 = vmatpush1.bf16.msra.mxu0 0
      %511 = vmatprep.subr.bf16.mxu0 0
      %512 = vmatpush1.bf16.msra.mxu0 0
      %513 = vmatprep.subr.bf16.mxu0 %v497
      %514 = vmatpush1.bf16.msra.mxu0 %v494
      %515 = vmatprep.subr.bf16.mxu0 0
      %516 = vmatpush2.bf16.msra.mxu0 0
      %517 = vmatprep.subr.bf16.mxu0 0
      %518 = vmatpush2.bf16.msra.mxu0 0
      %519 = vmatprep.subr.bf16.mxu0 0
      %520 = vmatpush2.bf16.msra.mxu0 0
      %521 = vmatprep.subr.bf16.mxu0 0
      %522 = vmatpush2.bf16.msra.mxu0 0
      %523 = vmatprep.subr.bf16.mxu0 0
      %524 = vmatpush2.bf16.msra.mxu0 0
      %525 = vmatprep.subr.bf16.mxu0 0
      %526 = vmatpush2.bf16.msra.mxu0 0
      %527 = vmatprep.subr.bf16.mxu0 0
      %528 = vmatpush2.bf16.msra.mxu0 0
      %529 = vmatprep.subr.bf16.mxu0 0
      %530 = vmatpush2.bf16.msra.mxu0 0
      %531 = vmatprep.mubr.bf16.mxu0 0
      %532 = vmatmul.mubr.bf16.gmra.mxu0 %v490
      %v533 = vpop.f32.mrf.mxu0
      %v534 = vadd.f32 0.0, %v533
      %v535 = vpop.f32.mrf.mxu0
      %v536 = vadd.f32 0.0, %v535
      %v537 = vpop.f32.mrf.mxu0
      %v538 = vadd.f32 0.0, %v537
      %v539 = vpop.f32.mrf.mxu0
      %v540 = vadd.f32 0.0, %v539
      %541 = vdwg.mxu0
      %v542 = vld [vmem:[%s7] sm:$0xff]
      %v543 = vld [vmem:[%s7 + $0x8] sm:$0xff]
      %545 = vset.pattern.permute.xlu0 0
      %546 = vperm.xlu0 %545, %v542
      %v547 = vpop.permute.xlu0 %546
      %550 = vset.pattern.permute.xlu0 0
      %551 = vperm.xlu0 %550, %v543
      %v552 = vpop.permute.xlu0 %551
      %v554 = vmul.f32 %v534, %v547
      %v555 = vmul.f32 %v536, %v547
      %v556 = vmul.f32 %v538, %v552
      %v557 = vmul.f32 %v540, %v552
      %v558 = vld [vmem:[%s8] sm:$0xff]
      %v559 = vld [vmem:[%s8 + $0x8] sm:$0xff]
      %561 = vset.pattern.permute.xlu0 0
      %562 = vperm.xlu0 %561, %v558
      %v563 = vpop.permute.xlu0 %562
      %566 = vset.pattern.permute.xlu0 0
      %567 = vperm.xlu0 %566, %v559
      %v568 = vpop.permute.xlu0 %567
      %v570 = vadd.f32 %v554, %v563
      %v571 = vadd.f32 %v555, %v563
      %v572 = vadd.f32 %v556, %v568
      %v573 = vadd.f32 %v557, %v568
      %v574 = vmax.f32 %v570, 0.0
      %v575 = vmax.f32 %v571, 0.0
      %v576 = vmax.f32 %v572, 0.0
      %v577 = vmax.f32 %v573, 0.0
      %v578 = vpack.c.bf16 %v576, %v574
      %v579 = vpack.c.bf16 %v577, %v575
      %v582 = vunpack.c.l.b16 %v578
      %v583 = vunpack.c.l.b16 %v579
      %v584 = vunpack.c.h.b16 %v578
      %v585 = vunpack.c.h.b16 %v579
      %v586 = vpack.c.b16 %v583, %v582
      %v587 = vpack.c.b16 %v585, %v584
      %590 = vst [vmem:[%s370] sm:$0xff] %v586
      %591 = vst [vmem:[%s370 + $0x8] sm:$0xff] %v587
      %s592 = smul.u32 2, %s25
      %p593 = scmp.lt.s32.totalorder %s24, 1
      %s594 = scalar_select %p593, %s24, 1
      %p595 = scmp.lt.s32.totalorder %s592, 1
      %s596 = scalar_select %p595, %s592, 1
      %s597 = smul.addr %s594, 4
      %s598 = sadd.s32 %s596, %s597
      %s599 = smul.addr %s598, 4
      %s600 = scalar_lea.vmem %s9, %s599
      // Predicated region
      $region57: #{head_conv_forward.2} parent=55 // pred_check
        %p601 = pneg %p248
      $region58: #{head_conv_forward.2} parent=55 // pred_check_branch
        %603 = sbr.rel (%p601) target = $region60
      $region59: #{head_conv_forward.2} parent=55 // pred_region
        %s604 = smul.u32 2, %s25
      $region60: #{head_conv_forward.2} parent=55 // pred_fallthru
        _
    $region56: #{head_conv_forward.2} parent=5 // pred_fallthru
      _
    %p605 = scmp.le.s32.totalorder 2, %s15
    // Predicated region
    $region61: #{head_conv_forward.2} parent=5 // pred_check
      %p606 = pneg %p605
    $region62: #{head_conv_forward.2} parent=5 // pred_check_branch
      %608 = sbr.rel (%p606) target = $region64
    $region63: #{head_conv_forward.2} parent=5 // pred_region
      %s609 = ssub.s32 %s15, 2
      // Predicated region
      $region65: #{head_conv_forward.2} parent=63 // pred_check
        %p610 = pneg %p254
      $region66: #{head_conv_forward.2} parent=63 // pred_check_branch
        %612 = sbr.rel (%p610) target = $region68
      $region67: #{head_conv_forward.2} parent=63 // pred_region
        %s613 = smul.u32 2, %s27
        %p614 = scmp.lt.s32.totalorder %s26, 1
        %s615 = scalar_select %p614, %s26, 1
        %p616 = scmp.lt.s32.totalorder %s613, 1
        %s617 = scalar_select %p616, %s613, 1
        %s618 = smul.addr %s615, 4
        %s619 = sadd.s32 %s617, %s618
        %s620 = smul.addr %s619, 4
        %s621 = scalar_lea.vmem %s9, %s620
      $region68: #{head_conv_forward.2} parent=63 // pred_fallthru
        _
    $region64: #{head_conv_forward.2} parent=5 // pred_fallthru
      _
  $region6: #{head_conv_forward.2} parent=0 // loop_footer
    %s19 = sadd.s32 1, %s15
  $region7: #{head_conv_forward.2} parent=0 // loop_footer_branch
    %14 = sbr.rel target = $region3
  $region8: #{head_conv_forward.2} parent=0 // loop_exit
    _

// kernel: head_conv_forward.3
$region0: #{head_conv_forward.3}
  #allocation0 [shape = 'u32[]', space=smem, size = 0x4, offset = 0x4, fixed_abs, tag = 'smem constant byte address 0x4 - core index']
  #allocation1 [shape = 'u32[144,128]{1,0:T(1,128)}', space=vmem, size = 0x12000, scoped, tag = 'internal scratch']
  #allocation2 [shape = 'bf16[16,512]{1,0:T(8,128)(2,1)}', space=vmem, size = 0x4000, scoped, tag = 'scratch operand']
  #allocation3 [shape = 'bf16[432,256]{1,0:T(8,128)(2,1)}', space=vmem, size = 0x36000, scoped, tag = 'scratch operand']
  %s0 = inlined_call_operand.vmem [shape: bf16[2,16,256], index: 0, kind: input, shape index: {}]
  %s1 = inlined_call_operand.vmem [shape: bf16[8,432], index: 1, kind: input, shape index: {}]
  %s2 = inlined_call_operand.vmem [shape: bf16[27,256], index: 2, kind: input, shape index: {}]
  %s3 = inlined_call_operand.vmem [shape: f32[2,8,256], index: 3, kind: output, shape index: {}]
  %s4 = sld [smem:[#allocation0]]
  $region45: #{head_conv_forward.3} parent=0
    _
  %s6 = ssub.s32 1, %s4
  %s7 = scalar_select 0, %s6, %s4
  loop: start=0, step=1, limit=4
  $region2: #{head_conv_forward.3} parent=0 // loop_pre_header
    _
  $region3: #{head_conv_forward.3} parent=0 // loop_header
    %s9 = sphi 0, %s13
    %p10 = scmp.ge.s32.totalorder %s9, 4
    %s19 = sphi 0, %s21
    %s22 = sphi 0, %s19
    %s23 = sphi 0, %s22
    %s39 = sphi 0, %s23
    %s43 = sphi 0, %s43
    %s45 = sphi 0, %s43
    %s46 = sphi 0, %s45
    %s60 = sphi 0, %s46
    %s64 = sphi 0, %s64
    %s66 = sphi 0, %s64
    %s67 = sphi 0, %s66
    %s81 = sphi 0, %s67
    %s87 = sphi 0, %s89
    %s90 = sphi 0, %s87
    %s91 = sphi 0, %s90
    %s107 = sphi 0, %s91
  $region4: #{head_conv_forward.3} parent=0 // loop_header_branch
    %12 = sbr.rel (%p10) target = $region8
  $region5: #{head_conv_forward.3} parent=0 // loop_body
    %s14 = ssub.s32 %s9, 1
    %s15 = ssub.s32 %s9, 2
    %s16 = sadd.s32 %s9, 1
    %s17 = ssub.s32 %s9, %s16
    %p18 = scmp.eq.s32.totalorder %s17, 0
    %s20 = sadd.s32 %s19, 1
    %s21 = scalar_select %p18, %s19, %s20
    %p24 = pneg %p18
    %p25 = scmp.eq.s32.totalorder %s9, 1
    %p26 = por %p24, %p25
    %p27 = scmp.ne.s32.totalorder %s19, %s22
    %p28 = scmp.eq.s32.totalorder %s9, 0
    %p29 = por %p27, %p28
    %p30 = scmp.ne.s32.totalorder %s19, %s22
    %p31 = scmp.eq.s32.totalorder %s14, 1
    %p32 = por %p30, %p31
    %p33 = scmp.ne.s32.totalorder %s22, %s23
    %p34 = scmp.eq.s32.totalorder %s14, 0
    %p35 = por %p33, %p34
    %p36 = scmp.ne.s32.totalorder %s22, %s23
    %p37 = scmp.eq.s32.totalorder %s15, 1
    %p38 = por %p36, %p37
    %p40 = scmp.ne.s32.totalorder %s23, %s39
    %p41 = scmp.eq.s32.totalorder %s15, 0
    %p42 = por %p40, %p41
    %s44 = sadd.s32 %s43, 1
    %p47 = scmp.eq.s32.totalorder %s9, 1
    %p48 = scmp.ne.s32.totalorder %s43, %s45
    %p49 = scmp.eq.s32.totalorder %s9, 0
    %p50 = por %p48, %p49
    %p51 = scmp.ne.s32.totalorder %s43, %s45
    %p52 = scmp.eq.s32.totalorder %s14, 1
    %p53 = por %p51, %p52
    %p54 = scmp.ne.s32.totalorder %s45, %s46
    %p55 = scmp.eq.s32.totalorder %s14, 0
    %p56 = por %p54, %p55
    %p57 = scmp.ne.s32.totalorder %s45, %s46
    %p58 = scmp.eq.s32.totalorder %s15, 1
    %p59 = por %p57, %p58
    %p61 = scmp.ne.s32.totalorder %s46, %s60
    %p62 = scmp.eq.s32.totalorder %s15, 0
    %p63 = por %p61, %p62
    %s65 = sadd.s32 %s64, 1
    %p68 = scmp.eq.s32.totalorder %s9, 1
    %p69 = scmp.ne.s32.totalorder %s64, %s66
    %p70 = scmp.eq.s32.totalorder %s9, 0
    %p71 = por %p69, %p70
    %p72 = scmp.ne.s32.totalorder %s64, %s66
    %p73 = scmp.eq.s32.totalorder %s14, 1
    %p74 = por %p72, %p73
    %p75 = scmp.ne.s32.totalorder %s66, %s67
    %p76 = scmp.eq.s32.totalorder %s14, 0
    %p77 = por %p75, %p76
    %p78 = scmp.ne.s32.totalorder %s66, %s67
    %p79 = scmp.eq.s32.totalorder %s15, 1
    %p80 = por %p78, %p79
    %p82 = scmp.ne.s32.totalorder %s67, %s81
    %p83 = scmp.eq.s32.totalorder %s15, 0
    %p84 = por %p82, %p83
    %s85 = ssub.s32 %s9, %s16
    %p86 = scmp.eq.s32.totalorder %s85, 0
    %s88 = sadd.s32 %s87, 1
    %s89 = scalar_select %p86, %s87, %s88
    %p92 = pneg %p86
    %p93 = scmp.eq.s32.totalorder %s9, 1
    %p94 = por %p92, %p93
    %p95 = scmp.ne.s32.totalorder %s87, %s90
    %p96 = scmp.eq.s32.totalorder %s9, 0
    %p97 = por %p95, %p96
    %p98 = scmp.ne.s32.totalorder %s87, %s90
    %p99 = scmp.eq.s32.totalorder %s14, 1
    %p100 = por %p98, %p99
    %p101 = scmp.ne.s32.totalorder %s90, %s91
    %p102 = scmp.eq.s32.totalorder %s14, 0
    %p103 = por %p101, %p102
    %p104 = scmp.ne.s32.totalorder %s90, %s91
    %p105 = scmp.eq.s32.totalorder %s15, 1
    %p106 = por %p104, %p105
    %p108 = scmp.ne.s32.totalorder %s91, %s107
    %p109 = scmp.eq.s32.totalorder %s15, 0
    %p110 = por %p108, %p109
    %p111 = scmp.le.s32.totalorder 1, %s9
    %p112 = scmp.lt.s32.totalorder %s9, 3
    %p113 = pnand %p111, %p112
    %p114 = pneg %p113
    // Predicated region
    $region9: #{head_conv_forward.3} parent=5 // pred_check
      _
    $region10: #{head_conv_forward.3} parent=5 // pred_check_branch
      %116 = sbr.rel (%p113) target = $region12
    $region11: #{head_conv_forward.3} parent=5 // pred_region
      %s117 = ssub.s32 %s9, 1
      // Predicated region
      $region13: #{head_conv_forward.3} parent=11 // pred_check
        %p118 = pneg %p56
      $region14: #{head_conv_forward.3} parent=11 // pred_check_branch
        %120 = sbr.rel (%p118) target = $region16
      $region15: #{head_conv_forward.3} parent=11 // pred_region
        _
      $region16: #{head_conv_forward.3} parent=11 // pred_fallthru
        _
      // Predicated region
      $region17: #{head_conv_forward.3} parent=11 // pred_check
        %p121 = pneg %p77
      $region18: #{head_conv_forward.3} parent=11 // pred_check_branch
        %123 = sbr.rel (%p121) target = $region20
      $region19: #{head_conv_forward.3} parent=11 // pred_region
        _
      $region20: #{head_conv_forward.3} parent=11 // pred_fallthru
        _
    $region12: #{head_conv_forward.3} parent=5 // pred_fallthru
      _
    %p124 = scmp.lt.s32.totalorder %s9, 2
    // Predicated region
    $region21: #{head_conv_forward.3} parent=5 // pred_check
      %p125 = pneg %p124
    $region22: #{head_conv_forward.3} parent=5 // pred_check_branch
      %127 = sbr.rel (%p125) target = $region24
    $region23: #{head_conv_forward.3} parent=5 // pred_region
      // Predicated region
      $region25: #{head_conv_forward.3} parent=23 // pred_check
        %p128 = pneg %p29
      $region26: #{head_conv_forward.3} parent=23 // pred_check_branch
        %130 = sbr.rel (%p128) target = $region28
      $region27: #{head_conv_forward.3} parent=23 // pred_region
        %p131 = scmp.lt.s32.totalorder %s9, 1
        %s132 = scalar_select %p131, %s9, 1
        %s133 = smul.addr %s132, 4
        %s134 = smul.addr %s133, 4
        %s135 = scalar_lea.vmem %s0, %s134
      $region28: #{head_conv_forward.3} parent=23 // pred_fallthru
        _
    $region24: #{head_conv_forward.3} parent=5 // pred_fallthru
      _
    %p136 = scmp.le.s32.totalorder 1, %s9
    %p137 = scmp.lt.s32.totalorder %s9, 3
    %p138 = pnand %p136, %p137
    %p139 = pneg %p138
    // Predicated region
    $region29: #{head_conv_forward.3} parent=5 // pred_check
      _
    $region30: #{head_conv_forward.3} parent=5 // pred_check_branch
      %141 = sbr.rel (%p138) target = $region32
    $region31: #{head_conv_forward.3} parent=5 // pred_region
      %s142 = ssub.s32 %s9, 1
      %p143 = scmp.lt.s32.totalorder %s14, 1
      %s144 = scalar_select %p143, %s14, 1
      %s145 = smul.addr %s144, 4
      %s146 = smul.addr %s145, 4
      %s147 = scalar_lea.vmem %s0, %s146
      %p148 = pneg %p35
      %p149 = pneg %p32
      %p150 = pneg %p56
      %p151 = pneg %p53
      %p152 = pneg %p77
      %p153 = pneg %p74
      %p154 = pneg %p103
      %p155 = pneg %p100
      %p156 = scmp.lt.s32.totalorder %s14, 1
      %s157 = scalar_select %p156, %s14, 1
      %s158 = smul.addr %s157, 2
      %s159 = smul.addr %s158, 8
      %s160 = scalar_lea.vmem %s3, %s159
      %p161 = scmp.lt.s32.totalorder %s14, 1
      %s162 = scalar_select %p161, %s14, 1
      %s163 = smul.addr %s162, 4
      %s164 = smul.addr %s163, 4
      %s165 = scalar_lea.vmem %s0, %s164
      %p166 = scmp.lt.s32.totalorder %s14, 1
      %s167 = scalar_select %p166, %s14, 1
      %s168 = smul.addr %s167, 2
      %s169 = smul.addr %s168, 8
      %s170 = scalar_lea.vmem %s3, %s169
      %172 = vst [vmem:[#allocation2] sm:$0xf] 0
      %173 = vst [vmem:[#allocation2 + $0x10] sm:$0xf] 0
      %174 = vst [vmem:[#allocation2 + $0xc] sm:$0xf] 0
      %175 = vst [vmem:[#allocation2 + $0x1c] sm:$0xf] 0
      %v176 = vld [vmem:[%s165] sm:$0xff]
      %v177 = vld [vmem:[%s165 + $0x8] sm:$0xff]
      %178 = vst [vmem:[#allocation2 + $0x4] sm:$0xff] %v176
      %179 = vst [vmem:[#allocation2 + $0x14] sm:$0xff] %v177
      %v180 = vld [vmem:[%s2] sm:$0xff]
      %v181 = vld [vmem:[%s2 + $0x8] sm:$0xff]
      %v182 = vld [vmem:[%s2 + $0x10] sm:$0xff]
      %v183 = vld [vmem:[%s2 + $0x18] sm:$0x33]
      %v184 = vld [vmem:[#allocation2] sm:$0xff]
      %v185 = vld [vmem:[#allocation2 + $0x8] sm:$0xf]
      %v186 = vld [vmem:[#allocation2 + $0x10] sm:$0xff]
      %v187 = vld [vmem:[#allocation2 + $0x18] sm:$0xf]
      %v189 = vunpack.c.l.b16 %v180
      %v190 = vunpack.c.h.b16 %v180
      %v191 = vpack.c.b16 %v189, %v189
      %v192 = vpack.c.b16 %v190, %v190
      %v194 = vpack.i.b16 %v191, %v191
      %v196 = vlaneseq
      %v197 = vshrl.u32 %v196, 7
      %v198 = vsub.s32 0, %v197
      %v199 = vrot.slane %v194, %v198
      %v201 = vpack.i.b16 %v192, %v192
      %v203 = vlaneseq
      %v204 = vshrl.u32 %v203, 7
      %v205 = vsub.s32 0, %v204
      %v206 = vrot.slane %v201, %v205
      %v209 = vunpack.c.l.b16 %v199
      %v210 = vunpack.c.l.b16 %v206
      %v211 = vpack.c.b16 %v210, %v209
      %212 = vrot.lane.b32.xlu0 %v211, 55
      %v213 = vpop.permute.xlu0 %212
      %v214 = vrot.slane %v213, 4
      %vm215 = vcmask 449536
      %v216 = vsel %vm215, %v214, %v213
      %v219 = vmul.bf16 %v184, %v216
      %v220 = vmul.bf16 %v185, %v214
      %v221 = vmul.bf16 %v186, %v216
      %v222 = vmul.bf16 %v187, %v214
      %227 = vrot.lane.b32.xlu0 %v219, 73
      %v228 = vpop.permute.xlu0 %227
      %229 = vrot.lane.b32.xlu0 %v220, 73
      %v230 = vpop.permute.xlu0 %229
      %231 = vrot.lane.b32.xlu0 %v221, 73
      %v232 = vpop.permute.xlu0 %231
      %233 = vrot.lane.b32.xlu0 %v222, 73
      %v234 = vpop.permute.xlu0 %233
      %v235 = vrot.slane %v228, 4
      %v236 = vrot.slane %v230, 4
      %v237 = vrot.slane %v232, 4
      %v238 = vrot.slane %v234, 4
      %vm239 = vcmask 1043456
      %v240 = vsel %vm239, %v235, %v236
      %vm241 = vcmask 596992
      %v242 = vsel %vm241, %v228, %v240
      %v243 = vsel %vm239, %v237, %v238
      %v244 = vsel %vm241, %v232, %v243
      %247 = vst [vmem:[#allocation3] sm:$0xff] %v242
      %248 = vst [vmem:[#allocation3 + $0x8] sm:$0xff] %v244
      %v249 = vld [vmem:[#allocation2] sm:$0xff]
      %v250 = vld [vmem:[#allocation2 + $0x8] sm:$0xf]
      %v251 = vld [vmem:[#allocation2 + $0x10] sm:$0xff]
      %v252 = vld [vmem:[#allocation2 + $0x18] sm:$0xf]
      %v253 = vshrl.u32 %v191, 16
      %v254 = vpack.i.b16 %v253, %v253
      %v256 = vlaneseq
      %v257 = vshrl.u32 %v256, 7
      %v258 = vsub.s32 0, %v257
      %v259 = vrot.slane %v254, %v258
      %v260 = vshrl.u32 %v192, 16
      %v261 = vpack.i.b16 %v260, %v260
      %v263 = vlaneseq
      %v264 = vshrl.u32 %v263, 7
      %v265 = vsub.s32 0, %v264
      %v266 = vrot.slane %v261, %v265
      %v269 = vunpack.c.l.b16 %v259
      %v270 = vunpack.c.l.b16 %v266
      %v271 = vpack.c.b16 %v270, %v269
      %272 = vrot.lane.b32.xlu0 %v271, 56
      %v273 = vpop.permute.xlu0 %272
      %v274 = vrot.slane %v273, 4
      %vm275 = vcmask 457728
      %v276 = vsel %vm275, %v274, %v273
      %v279 = vmul.bf16 %v249, %v276
      %v280 = vmul.bf16 %v250, %v274
      %v281 = vmul.bf16 %v251, %v276
      %v282 = vmul.bf16 %v252, %v274
      %287 = vrot.lane.b32.xlu0 %v279, 72
      %v288 = vpop.permute.xlu0 %287
      %289 = vrot.lane.b32.xlu0 %v280, 72
      %v290 = vpop.permute.xlu0 %289
      %291 = vrot.lane.b32.xlu0 %v281, 72
      %v292 = vpop.permute.xlu0 %291
      %293 = vrot.lane.b32.xlu0 %v282, 72
      %v294 = vpop.permute.xlu0 %293
      %v295 = vrot.slane %v288, 4
      %v296 = vrot.slane %v290, 4
      %v297 = vrot.slane %v292, 4
      %v298 = vrot.slane %v294, 4
      %v299 = vsel %vm239, %v295, %v296
      %vm300 = vcmask 588800
      %v301 = vsel %vm300, %v288, %v299
      %v302 = vsel %vm239, %v297, %v298
      %v303 = vsel %vm300, %v292, %v302
      %306 = vst [vmem:[#allocation3 + $0x10] sm:$0xff] %v301
      %307 = vst [vmem:[#allocation3 + $0x18] sm:$0xff] %v303
      %v308 = vld [vmem:[#allocation2] sm:$0xff]
      %v309 = vld [vmem:[#allocation2 + $0x8] sm:$0xf]
      %v310 = vld [vmem:[#allocation2 + $0x10] sm:$0xff]
      %v311 = vld [vmem:[#allocation2 + $0x18] sm:$0xf]
      %v312 = vlaneseq
      %v313 = vshrl.u32 %v312, 7
      %v314 = vsub.s32 1, %v313
      %v315 = vrot.slane %v194, %v314
      %v316 = vlaneseq
      %v317 = vshrl.u32 %v316, 7
      %v318 = vsub.s32 1, %v317
      %v319 = vrot.slane %v201, %v318
      %v322 = vunpack.c.l.b16 %v315
      %v323 = vunpack.c.l.b16 %v319
      %v324 = vpack.c.b16 %v323, %v322
      %325 = vrot.lane.b32.xlu0 %v324, 57
      %v326 = vpop.permute.xlu0 %325
      %v327 = vrot.slane %v326, 4
      %vm328 = vcmask 465920
      %v329 = vsel %vm328, %v327, %v326
      %v332 = vmul.bf16 %v308, %v329
      %v333 = vmul.bf16 %v309, %v327
      %v334 = vmul.bf16 %v310, %v329
      %v335 = vmul.bf16 %v311, %v327
      %340 = vrot.lane.b32.xlu0 %v332, 71
      %v341 = vpop.permute.xlu0 %340
      %342 = vrot.lane.b32.xlu0 %v333, 71
      %v343 = vpop.permute.xlu0 %342
      %344 = vrot.lane.b32.xlu0 %v334, 71
      %v345 = vpop.permute.xlu0 %344
      %346 = vrot.lane.b32.xlu0 %v335, 71
      %v347 = vpop.permute.xlu0 %346
      %v348 = vrot.slane %v341, 4
      %v349 = vrot.slane %v343, 4
      %v350 = vrot.slane %v345, 4
      %v351 = vrot.slane %v347, 4
      %v352 = vsel %vm239, %v348, %v349
      %vm353 = vcmask 580608
      %v354 = vsel %vm353, %v341, %v352
      %v355 = vsel %vm239, %v350, %v351
      %v356 = vsel %vm353, %v345, %v355
      %359 = vst [vmem:[#allocation3 + $0x20] sm:$0xff] %v354
      %360 = vst [vmem:[#allocation3 + $0x28] sm:$0xff] %v356
      %v361 = vld [vmem:[#allocation2] sm:$0xff]
      %v362 = vld [vmem:[#allocation2 + $0x8] sm:$0xf]
      %v363 = vld [vmem:[#allocation2 + $0x10] sm:$0xff]
      %v364 = vld [vmem:[#allocation2 + $0x18] sm:$0xf]
      %v365 = vlaneseq
      %v366 = vshrl.u32 %v365, 7
      %v367 = vsub.s32 1, %v366
      %v368 = vrot.slane %v254, %v367
      %v369 = vlaneseq
      %v370 = vshrl.u32 %v369, 7
      %v371 = vsub.s32 1, %v370
      %v372 = vrot.slane %v261, %v371
      %v375 = vunpack.c.l.b16 %v368
      %v376 = vunpack.c.l.b16 %v372
      %v377 = vpack.c.b16 %v376, %v375
      %378 = vrot.lane.b32.xlu0 %v377, 63
      %v379 = vpop.permute.xlu0 %378
      %v380 = vrot.slane %v379, 4
      %vm381 = vcmask 515072
      %v382 = vsel %vm381, %v380, %v379
      %v385 = vmul.bf16 %v361, %v382
      %v386 = vmul.bf16 %v362, %v380
      %v387 = vmul.bf16 %v363, %v382
      %v388 = vmul.bf16 %v364, %v380
      %393 = vrot.lane.b32.xlu0 %v385, 65
      %v394 = vpop.permute.xlu0 %393
      %395 = vrot.lane.b32.xlu0 %v386, 65
      %v396 = vpop.permute.xlu0 %395
      %397 = vrot.lane.b32.xlu0 %v387, 65
      %v398 = vpop.permute.xlu0 %397
      %399 = vrot.lane.b32.xlu0 %v388, 65
      %v400 = vpop.permute.xlu0 %399
      %v401 = vrot.slane %v394, 4
      %v402 = vrot.slane %v396, 4
      %v403 = vrot.slane %v398, 4
      %v404 = vrot.slane %v400, 4
      %v405 = vsel %vm239, %v401, %v402
      %vm406 = vcmask 531456
      %v407 = vsel %vm406, %v394, %v405
      %v408 = vsel %vm239, %v403, %v404
      %v409 = vsel %vm406, %v398, %v408
      %412 = vst [vmem:[#allocation3 + $0x30] sm:$0xff] %v407
      %413 = vst [vmem:[#allocation3 + $0x38] sm:$0xff] %v409
      %v414 = vld [vmem:[#allocation2] sm:$0xff]
      %v415 = vld [vmem:[#allocation2 + $0x8] sm:$0xf]
      %v416 = vld [vmem:[#allocation2 + $0x10] sm:$0xff]
      %v417 = vld [vmem:[#allocation2 + $0x18] sm:$0xf]
      %v418 = vlaneseq
      %v419 = vshrl.u32 %v418, 7
      %v420 = vsub.s32 2, %v419
      %v421 = vrot.slane %v194, %v420
      %v422 = vlaneseq
      %v423 = vshrl.u32 %v422, 7
      %v424 = vsub.s32 2, %v423
      %v425 = vrot.slane %v201, %v424
      %v428 = vunpack.c.l.b16 %v421
      %v429 = vunpack.c.l.b16 %v425
      %v430 = vpack.c.b16 %v429, %v428
      %431 = vrot.lane.b32.xlu0 %v430, 64
      %v432 = vpop.permute.xlu0 %431
      %v433 = vrot.slane %v432, 4
      %vm434 = vcmask 523264
      %v435 = vsel %vm434, %v433, %v432
      %v438 = vmul.bf16 %v414, %v435
      %v439 = vmul.bf16 %v415, %v433
      %v440 = vmul.bf16 %v416, %v435
      %v441 = vmul.bf16 %v417, %v433
      %446 = vrot.lane.b32.xlu0 %v438, 64
      %v447 = vpop.permute.xlu0 %446
      %448 = vrot.lane.b32.xlu0 %v439, 64
      %v449 = vpop.permute.xlu0 %448
      %450 = vrot.lane.b32.xlu0 %v440, 64
      %v451 = vpop.permute.xlu0 %450
      %452 = vrot.lane.b32.xlu0 %v441, 64
      %v453 = vpop.permute.xlu0 %452
      %v454 = vrot.slane %v447, 4
      %v455 = vrot.slane %v449, 4
      %v456 = vrot.slane %v451, 4
      %v457 = vrot.slane %v453, 4
      %v458 = vsel %vm239, %v454, %v455
      %v459 = vsel %vm434, %v447, %v458
      %v460 = vsel %vm239, %v456, %v457
      %v461 = vsel %vm434, %v451, %v460
      %464 = vst [vmem:[#allocation3 + $0x40] sm:$0xff] %v459
      %465 = vst [vmem:[#allocation3 + $0x48] sm:$0xff] %v461
      %v466 = vld [vmem:[#allocation2] sm:$0xff]
      %v467 = vld [vmem:[#allocation2 + $0x8] sm:$0xf]
      %v468 = vld [vmem:[#allocation2 + $0x10] sm:$0xff]
      %v469 = vld [vmem:[#allocation2 + $0x18] sm:$0xf]
      %v470 = vlaneseq
      %v471 = vshrl.u32 %v470, 7
      %v472 = vsub.s32 2, %v471
      %v473 = vrot.slane %v254, %v472
      %v474 = vlaneseq
      %v475 = vshrl.u32 %v474, 7
      %v476 = vsub.s32 2, %v475
      %v477 = vrot.slane %v261, %v476
      %v480 = vunpack.c.l.b16 %v473
      %v481 = vunpack.c.l.b16 %v477
      %v482 = vpack.c.b16 %v481, %v480
      %483 = vrot.lane.b32.xlu0 %v482, 65
      %v484 = vpop.permute.xlu0 %483
      %v485 = vrot.slane %v484, 4
      %v486 = vsel %vm406, %v485, %v484
      %v489 = vmul.bf16 %v466, %v486
      %v490 = vmul.bf16 %v467, %v485
      %v491 = vmul.bf16 %v468, %v486
      %v492 = vmul.bf16 %v469, %v485
      %497 = vrot.lane.b32.xlu0 %v489, 63
      %v498 = vpop.permute.xlu0 %497
      %499 = vrot.lane.b32.xlu0 %v490, 63
      %v500 = vpop.permute.xlu0 %499
      %501 = vrot.lane.b32.xlu0 %v491, 63
      %v502 = vpop.permute.xlu0 %501
      %503 = vrot.lane.b32.xlu0 %v492, 63
      %v504 = vpop.permute.xlu0 %503
      %v505 = vrot.slane %v498, 4
      %v506 = vrot.slane %v500, 4
      %v507 = vrot.slane %v502, 4
      %v508 = vrot.slane %v504, 4
      %v509 = vsel %vm239, %v505, %v506
      %v510 = vsel %vm381, %v498, %v509
      %v511 = vsel %vm239, %v507, %v508
      %v512 = vsel %vm381, %v502, %v511
      %515 = vst [vmem:[#allocation3 + $0x50] sm:$0xff] %v510
      %516 = vst [vmem:[#allocation3 + $0x58] sm:$0xff] %v512
      %v517 = vld [vmem:[#allocation2] sm:$0xff]
      %v518 = vld [vmem:[#allocation2 + $0x8] sm:$0xf]
      %v519 = vld [vmem:[#allocation2 + $0x10] sm:$0xff]
      %v520 = vld [vmem:[#allocation2 + $0x18] sm:$0xf]
      %v521 = vlaneseq
      %v522 = vshrl.u32 %v521, 7
      %v523 = vsub.s32 3, %v522
      %v524 = vrot.slane %v194, %v523
      %v525 = vlaneseq
      %v526 = vshrl.u32 %v525, 7
      %v527 = vsub.s32 3, %v526
      %v528 = vrot.slane %v201, %v527
      %v531 = vunpack.c.l.b16 %v524
      %v532 = vunpack.c.l.b16 %v528
      %v533 = vpack.c.b16 %v532, %v531
      %534 = vrot.lane.b32.xlu0 %v533, 71
      %v535 = vpop.permute.xlu0 %534
      %v536 = vrot.slane %v535, 4
      %v537 = vsel %vm353, %v536, %v535
      %v540 = vmul.bf16 %v517, %v537
      %v541 = vmul.bf16 %v518, %v536
      %v542 = vmul.bf16 %v519, %v537
      %v543 = vmul.bf16 %v520, %v536
      %548 = vrot.lane.b32.xlu0 %v540, 57
      %v549 = vpop.permute.xlu0 %548
      %550 = vrot.lane.b32.xlu0 %v541, 57
      %v551 = vpop.permute.xlu0 %550
      %552 = vrot.lane.b32.xlu0 %v542, 57
      %v553 = vpop.permute.xlu0 %552
      %554 = vrot.lane.b32.xlu0 %v543, 57
      %v555 = vpop.permute.xlu0 %554
      %v556 = vrot.slane %v549, 4
      %v557 = vrot.slane %v551, 4
      %v558 = vrot.slane %v553, 4
      %v559 = vrot.slane %v555, 4
      %v560 = vsel %vm239, %v556, %v557
      %v561 = vsel %vm328, %v549, %v560
      %v562 = vsel %vm239, %v558, %v559
      %v563 = vsel %vm328, %v553, %v562
      %566 = vst [vmem:[#allocation3 + $0x60] sm:$0xff] %v561
      %567 = vst [vmem:[#allocation3 + $0x68] sm:$0xff] %v563
      %v568 = vld [vmem:[#allocation2] sm:$0xff]
      %v569 = vld [vmem:[#allocation2 + $0x8] sm:$0xf]
      %v570 = vld [vmem:[#allocation2 + $0x10] sm:$0xff]
      %v571 = vld [vmem:[#allocation2 + $0x18] sm:$0xf]
      %v572 = vlaneseq
      %v573 = vshrl.u32 %v572, 7
      %v574 = vsub.s32 3, %v573
      %v575 = vrot.slane %v254, %v574
      %v576 = vlaneseq
      %v577 = vshrl.u32 %v576, 7
      %v578 = vsub.s32 3, %v577
      %v579 = vrot.slane %v261, %v578
      %v582 = vunpack.c.l.b16 %v575
      %v583 = vunpack.c.l.b16 %v579
      %v584 = vpack.c.b16 %v583, %v582
      %585 = vrot.lane.b32.xlu0 %v584, 72
      %v586 = vpop.permute.xlu0 %585
      %v587 = vrot.slane %v586, 4
      %v588 = vsel %vm300, %v587, %v586
      %v591 = vmul.bf16 %v568, %v588
      %v592 = vmul.bf16 %v569, %v587
      %v593 = vmul.bf16 %v570, %v588
      %v594 = vmul.bf16 %v571, %v587
      %599 = vrot.lane.b32.xlu0 %v591, 56
      %v600 = vpop.permute.xlu0 %599
      %601 = vrot.lane.b32.xlu0 %v592, 56
      %v602 = vpop.permute.xlu0 %601
      %603 = vrot.lane.b32.xlu0 %v593, 56
      %v604 = vpop.permute.xlu0 %603
      %605 = vrot.lane.b32.xlu0 %v594, 56
      %v606 = vpop.permute.xlu0 %605
      %v607 = vrot.slane %v600, 4
      %v608 = vrot.slane %v602, 4
      %v609 = vrot.slane %v604, 4
      %v610 = vrot.slane %v606, 4
      %v611 = vsel %vm239, %v607, %v608
      %v612 = vsel %vm275, %v600, %v611
      %v613 = vsel %vm239, %v609, %v610
      %v614 = vsel %vm275, %v604, %v613
      %617 = vst [vmem:[#allocation3 + $0x70] sm:$0xff] %v612
      %618 = vst [vmem:[#allocation3 + $0x78] sm:$0xff] %v614
      %v619 = vld [vmem:[#allocation2] sm:$0xff]
      %v620 = vld [vmem:[#allocation2 + $0x8] sm:$0xf]
      %v621 = vld [vmem:[#allocation2 + $0x10] sm:$0xff]
      %v622 = vld [vmem:[#allocation2 + $0x18] sm:$0xf]
      %v624 = vunpack.c.l.b16 %v181
      %v625 = vunpack.c.h.b16 %v181
      %v626 = vpack.c.b16 %v624, %v624
      %v627 = vpack.c.b16 %v625, %v625
      %v629 = vpack.i.b16 %v626, %v626
      %v631 = vlaneseq
      %v632 = vshrl.u32 %v631, 7
      %v633 = vsub.s32 0, %v632
      %v634 = vrot.slane %v629, %v633
      %v636 = vpack.i.b16 %v627, %v627
      %v638 = vlaneseq
      %v639 = vshrl.u32 %v638, 7
      %v640 = vsub.s32 0, %v639
      %v641 = vrot.slane %v636, %v640
      %v644 = vunpack.c.l.b16 %v634
      %v645 = vunpack.c.l.b16 %v641
      %v646 = vpack.c.b16 %v645, %v644
      %647 = vrot.lane.b32.xlu0 %v646, 73
      %v648 = vpop.permute.xlu0 %647
      %v649 = vrot.slane %v648, 4
      %v650 = vsel %vm241, %v649, %v648
      %v653 = vmul.bf16 %v619, %v650
      %v654 = vmul.bf16 %v620, %v649
      %v655 = vmul.bf16 %v621, %v650
      %v656 = vmul.bf16 %v622, %v649
      %661 = vrot.lane.b32.xlu0 %v653, 55
      %v662 = vpop.permute.xlu0 %661
      %663 = vrot.lane.b32.xlu0 %v654, 55
      %v664 = vpop.permute.xlu0 %663
      %665 = vrot.lane.b32.xlu0 %v655, 55
      %v666 = vpop.permute.xlu0 %665
      %667 = vrot.lane.b32.xlu0 %v656, 55
      %v668 = vpop.permute.xlu0 %667
      %v669 = vrot.slane %v662, 4
      %v670 = vrot.slane %v664, 4
      %v671 = vrot.slane %v666, 4
      %v672 = vrot.slane %v668, 4
      %v673 = vsel %vm239, %v669, %v670
      %v674 = vsel %vm215, %v662, %v673
      %v675 = vsel %vm239, %v671, %v672
      %v676 = vsel %vm215, %v666, %v675
      %679 = vst [vmem:[#allocation3 + $0x80] sm:$0xff] %v674
      %680 = vst [vmem:[#allocation3 + $0x88] sm:$0xff] %v676
      %v681 = vld [vmem:[#allocation2] sm:$0xff]
      %v682 = vld [vmem:[#allocation2 + $0x8] sm:$0xf]
      %v683 = vld [vmem:[#allocation2 + $0x10] sm:$0xff]
      %v684 = vld [vmem:[#allocation2 + $0x18] sm:$0xf]
      %v685 = vshrl.u32 %v626, 16
      %v686 = vpack.i.b16 %v685, %v685
      %v688 = vlaneseq
      %v689 = vshrl.u32 %v688, 7
      %v690 = vsub.s32 0, %v689
      %v691 = vrot.slane %v686, %v690
      %v692 = vshrl.u32 %v627, 16
      %v693 = vpack.i.b16 %v692, %v692
      %v695 = vlaneseq
      %v696 = vshrl.u32 %v695, 7
      %v697 = vsub.s32 0, %v696
      %v698 = vrot.slane %v693, %v697
      %v701 = vunpack.c.l.b16 %v691
      %v702 = vunpack.c.l.b16 %v698
      %v703 = vpack.c.b16 %v702, %v701
      %704 = vrot.lane.b32.xlu0 %v703, 119
      %v705 = vpop.permute.xlu0 %704
      %v706 = vrot.slane %v705, 4
      %vm707 = vcmask 973824
      %v708 = vsel %vm707, %v706, %v705
      %v711 = vmul.bf16 %v681, %v708
      %v712 = vmul.bf16 %v682, %v706
      %v713 = vmul.bf16 %v683, %v708
      %v714 = vmul.bf16 %v684, %v706
      %719 = vrot.lane.b32.xlu0 %v711, 9
      %v720 = vpop.permute.xlu0 %719
      %721 = vrot.lane.b32.xlu0 %v712, 9
      %v722 = vpop.permute.xlu0 %721
      %723 = vrot.lane.b32.xlu0 %v713, 9
      %v724 = vpop.permute.xlu0 %723
      %725 = vrot.lane.b32.xlu0 %v714, 9
      %v726 = vpop.permute.xlu0 %725
      %v727 = vrot.slane %v720, 4
      %v728 = vrot.slane %v722, 4
      %v729 = vrot.slane %v724, 4
      %v730 = vrot.slane %v726, 4
      %v731 = vsel %vm239, %v727, %v728
      %vm732 = vcmask 72704
      %v733 = vsel %vm732, %v720, %v731
      %v734 = vsel %vm239, %v729, %v730
      %v735 = vsel %vm732, %v724, %v734
      %738 = vst [vmem:[#allocation3 + $0x90] sm:$0xff] %v733
      %739 = vst [vmem:[#allocation3 + $0x98] sm:$0xff] %v735
      %v740 = vld [vmem:[#allocation2] sm:$0xff]
      %v741 = vld [vmem:[#allocation2 + $0x8] sm:$0xf]
      %v742 = vld [vmem:[#allocation2 + $0x10] sm:$0xff]
      %v743 = vld [vmem:[#allocation2 + $0x18] sm:$0xf]
      %v744 = vlaneseq
      %v745 = vshrl.u32 %v744, 7
      %v746 = vsub.s32 1, %v745
      %v747 = vrot.slane %v629, %v746
      %v748 = vlaneseq
      %v749 = vshrl.u32 %v748, 7
      %v750 = vsub.s32 1, %v749
      %v751 = vrot.slane %v636, %v750
      %v754 = vunpack.c.l.b16 %v747
      %v755 = vunpack.c.l.b16 %v751
      %v756 = vpack.c.b16 %v755, %v754
      %757 = vrot.lane.b32.xlu0 %v756, 120
      %v758 = vpop.permute.xlu0 %757
      %v759 = vrot.slane %v758, 4
      %vm760 = vcmask 982016
      %v761 = vsel %vm760, %v759, %v758
      %v764 = vmul.bf16 %v740, %v761
      %v765 = vmul.bf16 %v741, %v759
      %v766 = vmul.bf16 %v742, %v761
      %v767 = vmul.bf16 %v743, %v759
      %772 = vrot.lane.b32.xlu0 %v764, 8
      %v773 = vpop.permute.xlu0 %772
      %774 = vrot.lane.b32.xlu0 %v765, 8
      %v775 = vpop.permute.xlu0 %774
      %776 = vrot.lane.b32.xlu0 %v766, 8
      %v777 = vpop.permute.xlu0 %776
      %778 = vrot.lane.b32.xlu0 %v767, 8
      %v779 = vpop.permute.xlu0 %778
      %v780 = vrot.slane %v773, 4
      %v781 = vrot.slane %v775, 4
      %v782 = vrot.slane %v777, 4
      %v783 = vrot.slane %v779, 4
      %v784 = vsel %vm239, %v780, %v781
      %vm785 = vcmask 64512
      %v786 = vsel %vm785, %v773, %v784
      %v787 = vsel %vm239, %v782, %v783
      %v788 = vsel %vm785, %v777, %v787
      %791 = vst [vmem:[#allocation3 + $0xa0] sm:$0xff] %v786
      %792 = vst [vmem:[#allocation3 + $0xa8] sm:$0xff] %v788
      %v793 = vld [vmem:[#allocation2] sm:$0xff]
      %v794 = vld [vmem:[#allocation2 + $0x8] sm:$0xf]
      %v795 = vld [vmem:[#allocation2 + $0x10] sm:$0xff]
      %v796 = vld [vmem:[#allocation2 + $0x18] sm:$0xf]
      %v797 = vlaneseq
      %v798 = vshrl.u32 %v797, 7
      %v799 = vsub.s32 1, %v798
      %v800 = vrot.slane %v686, %v799
      %v801 = vlaneseq
      %v802 = vshrl.u32 %v801, 7
      %v803 = vsub.s32 1, %v802
      %v804 = vrot.slane %v693, %v803
      %v807 = vunpack.c.l.b16 %v800
      %v808 = vunpack.c.l.b16 %v804
      %v809 = vpack.c.b16 %v808, %v807
      %810 = vrot.lane.b32.xlu0 %v809, 121
      %v811 = vpop.permute.xlu0 %810
      %v812 = vrot.slane %v811, 4
      %vm813 = vcmask 990208
      %v814 = vsel %vm813, %v812, %v811
      %v817 = vmul.bf16 %v793, %v814
      %v818 = vmul.bf16 %v794, %v812
      %v819 = vmul.bf16 %v795, %v814
      %v820 = vmul.bf16 %v796, %v812
      %825 = vrot.lane.b32.xlu0 %v817, 7
      %v826 = vpop.permute.xlu0 %825
      %827 = vrot.lane.b32.xlu0 %v818, 7
      %v828 = vpop.permute.xlu0 %827
      %829 = vrot.lane.b32.xlu0 %v819, 7
      %v830 = vpop.permute.xlu0 %829
      %831 = vrot.lane.b32.xlu0 %v820, 7
      %v832 = vpop.permute.xlu0 %831
      %v833 = vrot.slane %v826, 4
      %v834 = vrot.slane %v828, 4
      %v835 = vrot.slane %v830, 4
      %v836 = vrot.slane %v832, 4
      %v837 = vsel %vm239, %v833, %v834
      %vm838 = vcmask 56320
      %v839 = vsel %vm838, %v826, %v837
      %v840 = vsel %vm239, %v835, %v836
      %v841 = vsel %vm838, %v830, %v840
      %844 = vst [vmem:[#allocation3 + $0xb0] sm:$0xff] %v839
      %845 = vst [vmem:[#allocation3 + $0xb8] sm:$0xff] %v841
      %v846 = vld [vmem:[#allocation2] sm:$0xff]
      %v847 = vld [vmem:[#allocation2 + $0x8] sm:$0xf]
      %v848 = vld [vmem:[#allocation2 + $0x10] sm:$0xff]
      %v849 = vld [vmem:[#allocation2 + $0x18] sm:$0xf]
      %v850 = vlaneseq
      %v851 = vshrl.u32 %v850, 7
      %v852 = vsub.s32 2, %v851
      %v853 = vrot.slane %v629, %v852
      %v854 = vlaneseq
      %v855 = vshrl.u32 %v854, 7
      %v856 = vsub.s32 2, %v855
      %v857 = vrot.slane %v636, %v856
      %v860 = vunpack.c.l.b16 %v853
      %v861 = vunpack.c.l.b16 %v857
      %v862 = vpack.c.b16 %v861, %v860
      %863 = vrot.lane.b32.xlu0 %v862, 127
      %v864 = vpop.permute.xlu0 %863
      %v865 = vrot.slane %v864, 4
      %vm866 = vcmask 1039360
      %v867 = vsel %vm866, %v865, %v864
      %v870 = vmul.bf16 %v846, %v867
      %v871 = vmul.bf16 %v847, %v865
      %v872 = vmul.bf16 %v848, %v867
      %v873 = vmul.bf16 %v849, %v865
      %878 = vrot.lane.b32.xlu0 %v870, 1
      %v879 = vpop.permute.xlu0 %878
      %880 = vrot.lane.b32.xlu0 %v871, 1
      %v881 = vpop.permute.xlu0 %880
      %882 = vrot.lane.b32.xlu0 %v872, 1
      %v883 = vpop.permute.xlu0 %882
      %884 = vrot.lane.b32.xlu0 %v873, 1
      %v885 = vpop.permute.xlu0 %884
      %v886 = vrot.slane %v879, 4
      %v887 = vrot.slane %v881, 4
      %v888 = vrot.slane %v883, 4
      %v889 = vrot.slane %v885, 4
      %v890 = vsel %vm239, %v886, %v887
      %vm891 = vcmask 7168
      %v892 = vsel %vm891, %v879, %v890
      %v893 = vsel %vm239, %v888, %v889
      %v894 = vsel %vm891, %v883, %v893
      %897 = vst [vmem:[#allocation3 + $0xc0] sm:$0xff] %v892
      %898 = vst [vmem:[#allocation3 + $0xc8] sm:$0xff] %v894
      %v899 = vld [vmem:[#allocation2 + $0x4] sm:$0xff]
      %v900 = vld [vmem:[#allocation2 + $0x14] sm:$0xff]
      %v901 = vlaneseq
      %v902 = vshrl.u32 %v901, 7
      %v903 = vsub.s32 2, %v902
      %v904 = vrot.slane %v686, %v903
      %v905 = vlaneseq
      %v906 = vshrl.u32 %v905, 7
      %v907 = vsub.s32 2, %v906
      %v908 = vrot.slane %v693, %v907
      %v911 = vunpack.c.l.b16 %v904
      %v912 = vunpack.c.l.b16 %v908
      %v913 = vpack.c.b16 %v912, %v911
      %v915 = vmul.bf16 %v899, %v913
      %v916 = vmul.bf16 %v900, %v913
      %917 = vst [vmem:[#allocation3 + $0xd0] sm:$0xff] %v915
      %918 = vst [vmem:[#allocation3 + $0xd8] sm:$0xff] %v916
      %v919 = vld [vmem:[#allocation2 + $0x4] sm:$0xff]
      %v920 = vld [vmem:[#allocation2 + $0xc] sm:$0xf]
      %v921 = vld [vmem:[#allocation2 + $0x14] sm:$0xff]
      %v922 = vld [vmem:[#allocation2 + $0x1c] sm:$0xf]
      %v923 = vlaneseq
      %v924 = vshrl.u32 %v923, 7
      %v925 = vsub.s32 3, %v924
      %v926 = vrot.slane %v629, %v925
      %v927 = vlaneseq
      %v928 = vshrl.u32 %v927, 7
      %v929 = vsub.s32 3, %v928
      %v930 = vrot.slane %v636, %v929
      %v933 = vunpack.c.l.b16 %v926
      %v934 = vunpack.c.l.b16 %v930
      %v935 = vpack.c.b16 %v934, %v933
      %936 = vrot.lane.b32.xlu0 %v935, 1
      %v937 = vpop.permute.xlu0 %936
      %v938 = vrot.slane %v937, 4
      %v939 = vsel %vm891, %v938, %v937
      %v942 = vmul.bf16 %v919, %v939
      %v943 = vmul.bf16 %v920, %v938
      %v944 = vmul.bf16 %v921, %v939
      %v945 = vmul.bf16 %v922, %v938
      %950 = vrot.lane.b32.xlu0 %v942, 127
      %v951 = vpop.permute.xlu0 %950
      %952 = vrot.lane.b32.xlu0 %v943, 127
      %v953 = vpop.permute.xlu0 %952
      %954 = vrot.lane.b32.xlu0 %v944, 127
      %v955 = vpop.permute.xlu0 %954
      %956 = vrot.lane.b32.xlu0 %v945, 127
      %v957 = vpop.permute.xlu0 %956
      %v958 = vrot.slane %v951, 4
      %v959 = vrot.slane %v953, 4
      %v960 = vrot.slane %v955, 4
      %v961 = vrot.slane %v957, 4
      %v962 = vsel %vm239, %v958, %v959
      %v963 = vsel %vm866, %v951, %v962
      %v964 = vsel %vm239, %v960, %v961
      %v965 = vsel %vm866, %v955, %v964
      %968 = vst [vmem:[#allocation3 + $0xe0] sm:$0xff] %v963
      %969 = vst [vmem:[#allocation3 + $0xe8] sm:$0xff] %v965
      %v970 = vld [vmem:[#allocation2 + $0x4] sm:$0xff]
      %v971 = vld [vmem:[#allocation2 + $0xc] sm:$0xf]
      %v972 = vld [vmem:[#allocation2 + $0x14] sm:$0xff]
      %v973 = vld [vmem:[#allocation2 + $0x1c] sm:$0xf]
      %v974 = vlaneseq
      %v975 = vshrl.u32 %v974, 7
      %v976 = vsub.s32 3, %v975
      %v977 = vrot.slane %v686, %v976
      %v978 = vlaneseq
      %v979 = vshrl.u32 %v978, 7
      %v980 = vsub.s32 3, %v979
      %v981 = vrot.slane %v693, %v980
      %v984 = vunpack.c.l.b16 %v977
      %v985 = vunpack.c.l.b16 %v981
      %v986 = vpack.c.b16 %v985, %v984
      %987 = vrot.lane.b32.xlu0 %v986, 7
      %v988 = vpop.permute.xlu0 %987
      %v989 = vrot.slane %v988, 4
      %v990 = vsel %vm838, %v989, %v988
      %v993 = vmul.bf16 %v970, %v990
      %v994 = vmul.bf16 %v971, %v989
      %v995 = vmul.bf16 %v972, %v990
      %v996 = vmul.bf16 %v973, %v989
      %1001 = vrot.lane.b32.xlu0 %v993, 121
      %v1002 = vpop.permute.xlu0 %1001
      %1003 = vrot.lane.b32.xlu0 %v994, 121
      %v1004 = vpop.permute.xlu0 %1003
      %1005 = vrot.lane.b32.xlu0 %v995, 121
      %v1006 = vpop.permute.xlu0 %1005
      %1007 = vrot.lane.b32.xlu0 %v996, 121
      %v1008 = vpop.permute.xlu0 %1007
      %v1009 = vrot.slane %v1002, 4
      %v1010 = vrot.slane %v1004, 4
      %v1011 = vrot.slane %v1006, 4
      %v1012 = vrot.slane %v1008, 4
      %v1013 = vsel %vm239, %v1009, %v1010
      %v1014 = vsel %vm813, %v1002, %v1013
      %v1015 = vsel %vm239, %v1011, %v1012
      %v1016 = vsel %vm813, %v1006, %v1015
      %1019 = vst [vmem:[#allocation3 + $0xf0] sm:$0xff] %v1014
      %1020 = vst [vmem:[#allocation3 + $0xf8] sm:$0xff] %v1016
      %v1021 = vld [vmem:[#allocation2 + $0x4] sm:$0xff]
      %v1022 = vld [vmem:[#allocation2 + $0xc] sm:$0xf]
      %v1023 = vld [vmem:[#allocation2 + $0x14] sm:$0xff]
      %v1024 = vld [vmem:[#allocation2 + $0x1c] sm:$0xf]
      %v1026 = vunpack.c.l.b16 %v182
      %v1027 = vunpack.c.h.b16 %v182
      %v1028 = vpack.c.b16 %v1026, %v1026
      %v1029 = vpack.c.b16 %v1027, %v1027
      %v1031 = vpack.i.b16 %v1028, %v1028
      %v1033 = vlaneseq
      %v1034 = vshrl.u32 %v1033, 7
      %v1035 = vsub.s32 0, %v1034
      %v1036 = vrot.slane %v1031, %v1035
      %v1038 = vpack.i.b16 %v1029, %v1029
      %v1040 = vlaneseq
      %v1041 = vshrl.u32 %v1040, 7
      %v1042 = vsub.s32 0, %v1041
      %v1043 = vrot.slane %v1038, %v1042
      %v1046 = vunpack.c.l.b16 %v1036
      %v1047 = vunpack.c.l.b16 %v1043
      %v1048 = vpack.c.b16 %v1047, %v1046
      %1049 = vrot.lane.b32.xlu0 %v1048, 8
      %v1050 = vpop.permute.xlu0 %1049
      %v1051 = vrot.slane %v1050, 4
      %v1052 = vsel %vm785, %v1051, %v1050
      %v1055 = vmul.bf16 %v1021, %v1052
      %v1056 = vmul.bf16 %v1022, %v1051
      %v1057 = vmul.bf16 %v1023, %v1052
      %v1058 = vmul.bf16 %v1024, %v1051
      %1063 = vrot.lane.b32.xlu0 %v1055, 120
      %v1064 = vpop.permute.xlu0 %1063
      %1065 = vrot.lane.b32.xlu0 %v1056, 120
      %v1066 = vpop.permute.xlu0 %1065
      %1067 = vrot.lane.b32.xlu0 %v1057, 120
      %v1068 = vpop.permute.xlu0 %1067
      %1069 = vrot.lane.b32.xlu0 %v1058, 120
      %v1070 = vpop.permute.xlu0 %1069
      %v1071 = vrot.slane %v1064, 4
      %v1072 = vrot.slane %v1066, 4
      %v1073 = vrot.slane %v1068, 4
      %v1074 = vrot.slane %v1070, 4
      %v1075 = vsel %vm239, %v1071, %v1072
      %v1076 = vsel %vm760, %v1064, %v1075
      %v1077 = vsel %vm239, %v1073, %v1074
      %v1078 = vsel %vm760, %v1068, %v1077
      %1081 = vst [vmem:[#allocation3 + $0x100] sm:$0xff] %v1076
      %1082 = vst [vmem:[#allocation3 + $0x108] sm:$0xff] %v1078
      %v1083 = vld [vmem:[#allocation2 + $0x4] sm:$0xff]
      %v1084 = vld [vmem:[#allocation2 + $0xc] sm:$0xf]
      %v1085 = vld [vmem:[#allocation2 + $0x14] sm:$0xff]
      %v1086 = vld [vmem:[#allocation2 + $0x1c] sm:$0xf]
      %v1087 = vshrl.u32 %v1028, 16
      %v1088 = vpack.i.b16 %v1087, %v1087
      %v1090 = vlaneseq
      %v1091 = vshrl.u32 %v1090, 7
      %v1092 = vsub.s32 0, %v1091
      %v1093 = vrot.slane %v1088, %v1092
      %v1094 = vshrl.u32 %v1029, 16
      %v1095 = vpack.i.b16 %v1094, %v1094
      %v1097 = vlaneseq
      %v1098 = vshrl.u32 %v1097, 7
      %v1099 = vsub.s32 0, %v1098
      %v1100 = vrot.slane %v1095, %v1099
      %v1103 = vunpack.c.l.b16 %v1093
      %v1104 = vunpack.c.l.b16 %v1100
      %v1105 = vpack.c.b16 %v1104, %v1103
      %1106 = vrot.lane.b32.xlu0 %v1105, 9
      %v1107 = vpop.permute.xlu0 %1106
      %v1108 = vrot.slane %v1107, 4
      %v1109 = vsel %vm732, %v1108, %v1107
      %v1112 = vmul.bf16 %v1083, %v1109
      %v1113 = vmul.bf16 %v1084, %v1108
      %v1114 = vmul.bf16 %v1085, %v1109
      %v1115 = vmul.bf16 %v1086, %v1108
      %1120 = vrot.lane.b32.xlu0 %v1112, 119
      %v1121 = vpop.permute.xlu0 %1120
      %1122 = vrot.lane.b32.xlu0 %v1113, 119
      %v1123 = vpop.permute.xlu0 %1122
      %1124 = vrot.lane.b32.xlu0 %v1114, 119
      %v1125 = vpop.permute.xlu0 %1124
      %1126 = vrot.lane.b32.xlu0 %v1115, 119
      %v1127 = vpop.permute.xlu0 %1126
      %v1128 = vrot.slane %v1121, 4
      %v1129 = vrot.slane %v1123, 4
      %v1130 = vrot.slane %v1125, 4
      %v1131 = vrot.slane %v1127, 4
      %v1132 = vsel %vm239, %v1128, %v1129
      %v1133 = vsel %vm707, %v1121, %v1132
      %v1134 = vsel %vm239, %v1130, %v1131
      %v1135 = vsel %vm707, %v1125, %v1134
      %1138 = vst [vmem:[#allocation3 + $0x110] sm:$0xff] %v1133
      %1139 = vst [vmem:[#allocation3 + $0x118] sm:$0xff] %v1135
      %v1140 = vld [vmem:[#allocation2 + $0x4] sm:$0xff]
      %v1141 = vld [vmem:[#allocation2 + $0xc] sm:$0xf]
      %v1142 = vld [vmem:[#allocation2 + $0x14] sm:$0xff]
      %v1143 = vld [vmem:[#allocation2 + $0x1c] sm:$0xf]
      %v1144 = vlaneseq
      %v1145 = vshrl.u32 %v1144, 7
      %v1146 = vsub.s32 1, %v1145
      %v1147 = vrot.slane %v1031, %v1146
      %v1148 = vlaneseq
      %v1149 = vshrl.u32 %v1148, 7
      %v1150 = vsub.s32 1, %v1149
      %v1151 = vrot.slane %v1038, %v1150
      %v1154 = vunpack.c.l.b16 %v1147
      %v1155 = vunpack.c.l.b16 %v1151
      %v1156 = vpack.c.b16 %v1155, %v1154
      %1157 = vrot.lane.b32.xlu0 %v1156, 55
      %v1158 = vpop.permute.xlu0 %1157
      %v1159 = vrot.slane %v1158, 4
      %v1160 = vsel %vm215, %v1159, %v1158
      %v1163 = vmul.bf16 %v1140, %v1160
      %v1164 = vmul.bf16 %v1141, %v1159
      %v1165 = vmul.bf16 %v1142, %v1160
      %v1166 = vmul.bf16 %v1143, %v1159
      %1171 = vrot.lane.b32.xlu0 %v1163, 73
      %v1172 = vpop.permute.xlu0 %1171
      %1173 = vrot.lane.b32.xlu0 %v1164, 73
      %v1174 = vpop.permute.xlu0 %1173
      %1175 = vrot.lane.b32.xlu0 %v1165, 73
      %v1176 = vpop.permute.xlu0 %1175
      %1177 = vrot.lane.b32.xlu0 %v1166, 73
      %v1178 = vpop.permute.xlu0 %1177
      %v1179 = vrot.slane %v1172, 4
      %v1180 = vrot.slane %v1174, 4
      %v1181 = vrot.slane %v1176, 4
      %v1182 = vrot.slane %v1178, 4
      %v1183 = vsel %vm239, %v1179, %v1180
      %v1184 = vsel %vm241, %v1172, %v1183
      %v1185 = vsel %vm239, %v1181, %v1182
      %v1186 = vsel %vm241, %v1176, %v1185
      %1189 = vst [vmem:[#allocation3 + $0x120] sm:$0xff] %v1184
      %1190 = vst [vmem:[#allocation3 + $0x128] sm:$0xff] %v1186
      %v1191 = vld [vmem:[#allocation2 + $0x4] sm:$0xff]
      %v1192 = vld [vmem:[#allocation2 + $0xc] sm:$0xf]
      %v1193 = vld [vmem:[#allocation2 + $0x14] sm:$0xff]
      %v1194 = vld [vmem:[#allocation2 + $0x1c] sm:$0xf]
      %v1195 = vlaneseq
      %v1196 = vshrl.u32 %v1195, 7
      %v1197 = vsub.s32 1, %v1196
      %v1198 = vrot.slane %v1088, %v1197
      %v1199 = vlaneseq
      %v1200 = vshrl.u32 %v1199, 7
      %v1201 = vsub.s32 1, %v1200
      %v1202 = vrot.slane %v1095, %v1201
      %v1205 = vunpack.c.l.b16 %v1198
      %v1206 = vunpack.c.l.b16 %v1202
      %v1207 = vpack.c.b16 %v1206, %v1205
      %1208 = vrot.lane.b32.xlu0 %v1207, 56
      %v1209 = vpop.permute.xlu0 %1208
      %v1210 = vrot.slane %v1209, 4
      %v1211 = vsel %vm275, %v1210, %v1209
      %v1214 = vmul.bf16 %v1191, %v1211
      %v1215 = vmul.bf16 %v1192, %v1210
      %v1216 = vmul.bf16 %v1193, %v1211
      %v1217 = vmul.bf16 %v1194, %v1210
      %1222 = vrot.lane.b32.xlu0 %v1214, 72
      %v1223 = vpop.permute.xlu0 %1222
      %1224 = vrot.lane.b32.xlu0 %v1215, 72
      %v1225 = vpop.permute.xlu0 %1224
      %1226 = vrot.lane.b32.xlu0 %v1216, 72
      %v1227 = vpop.permute.xlu0 %1226
      %1228 = vrot.lane.b32.xlu0 %v1217, 72
      %v1229 = vpop.permute.xlu0 %1228
      %v1230 = vrot.slane %v1223, 4
      %v1231 = vrot.slane %v1225, 4
      %v1232 = vrot.slane %v1227, 4
      %v1233 = vrot.slane %v1229, 4
      %v1234 = vsel %vm239, %v1230, %v1231
      %v1235 = vsel %vm300, %v1223, %v1234
      %v1236 = vsel %vm239, %v1232, %v1233
      %v1237 = vsel %vm300, %v1227, %v1236
      %1240 = vst [vmem:[#allocation3 + $0x130] sm:$0xff] %v1235
      %1241 = vst [vmem:[#allocation3 + $0x138] sm:$0xff] %v1237
      %v1242 = vld [vmem:[#allocation2 + $0x4] sm:$0xff]
      %v1243 = vld [vmem:[#allocation2 + $0xc] sm:$0xf]
      %v1244 = vld [vmem:[#allocation2 + $0x14] sm:$0xff]
      %v1245 = vld [vmem:[#allocation2 + $0x1c] sm:$0xf]
      %v1246 = vlaneseq
      %v1247 = vshrl.u32 %v1246, 7
      %v1248 = vsub.s32 2, %v1247
      %v1249 = vrot.slane %v1031, %v1248
      %v1250 = vlaneseq
      %v1251 = vshrl.u32 %v1250, 7
      %v1252 = vsub.s32 2, %v1251
      %v1253 = vrot.slane %v1038, %v1252
      %v1256 = vunpack.c.l.b16 %v1249
      %v1257 = vunpack.c.l.b16 %v1253
      %v1258 = vpack.c.b16 %v1257, %v1256
      %1259 = vrot.lane.b32.xlu0 %v1258, 57
      %v1260 = vpop.permute.xlu0 %1259
      %v1261 = vrot.slane %v1260, 4
      %v1262 = vsel %vm328, %v1261, %v1260
      %v1265 = vmul.bf16 %v1242, %v1262
      %v1266 = vmul.bf16 %v1243, %v1261
      %v1267 = vmul.bf16 %v1244, %v1262
      %v1268 = vmul.bf16 %v1245, %v1261
      %1273 = vrot.lane.b32.xlu0 %v1265, 71
      %v1274 = vpop.permute.xlu0 %1273
      %1275 = vrot.lane.b32.xlu0 %v1266, 71
      %v1276 = vpop.permute.xlu0 %1275
      %1277 = vrot.lane.b32.xlu0 %v1267, 71
      %v1278 = vpop.permute.xlu0 %1277
      %1279 = vrot.lane.b32.xlu0 %v1268, 71
      %v1280 = vpop.permute.xlu0 %1279
      %v1281 = vrot.slane %v1274, 4
      %v1282 = vrot.slane %v1276, 4
      %v1283 = vrot.slane %v1278, 4
      %v1284 = vrot.slane %v1280, 4
      %v1285 = vsel %vm239, %v1281, %v1282
      %v1286 = vsel %vm353, %v1274, %v1285
      %v1287 = vsel %vm239, %v1283, %v1284
      %v1288 = vsel %vm353, %v1278, %v1287
      %1291 = vst [vmem:[#allocation3 + $0x140] sm:$0xff] %v1286
      %1292 = vst [vmem:[#allocation3 + $0x148] sm:$0xff] %v1288
      %v1293 = vld [vmem:[#allocation2 + $0x4] sm:$0xff]
      %v1294 = vld [vmem:[#allocation2 + $0xc] sm:$0xf]
      %v1295 = vld [vmem:[#allocation2 + $0x14] sm:$0xff]
      %v1296 = vld [vmem:[#allocation2 + $0x1c] sm:$0xf]
      %v1297 = vlaneseq
      %v1298 = vshrl.u32 %v1297, 7
      %v1299 = vsub.s32 2, %v1298
      %v1300 = vrot.slane %v1088, %v1299
      %v1301 = vlaneseq
      %v1302 = vshrl.u32 %v1301, 7
      %v1303 = vsub.s32 2, %v1302
      %v1304 = vrot.slane %v1095, %v1303
      %v1307 = vunpack.c.l.b16 %v1300
      %v1308 = vunpack.c.l.b16 %v1304
      %v1309 = vpack.c.b16 %v1308, %v1307
      %1310 = vrot.lane.b32.xlu0 %v1309, 63
      %v1311 = vpop.permute.xlu0 %1310
      %v1312 = vrot.slane %v1311, 4
      %v1313 = vsel %vm381, %v1312, %v1311
      %v1316 = vmul.bf16 %v1293, %v1313
      %v1317 = vmul.bf16 %v1294, %v1312
      %v1318 = vmul.bf16 %v1295, %v1313
      %v1319 = vmul.bf16 %v1296, %v1312
      %1324 = vrot.lane.b32.xlu0 %v1316, 65
      %v1325 = vpop.permute.xlu0 %1324
      %1326 = vrot.lane.b32.xlu0 %v1317, 65
      %v1327 = vpop.permute.xlu0 %1326
      %1328 = vrot.lane.b32.xlu0 %v1318, 65
      %v1329 = vpop.permute.xlu0 %1328
      %1330 = vrot.lane.b32.xlu0 %v1319, 65
      %v1331 = vpop.permute.xlu0 %1330
      %v1332 = vrot.slane %v1325, 4
      %v1333 = vrot.slane %v1327, 4
      %v1334 = vrot.slane %v1329, 4
      %v1335 = vrot.slane %v1331, 4
      %v1336 = vsel %vm239, %v1332, %v1333
      %v1337 = vsel %vm406, %v1325, %v1336
      %v1338 = vsel %vm239, %v1334, %v1335
      %v1339 = vsel %vm406, %v1329, %v1338
      %1342 = vst [vmem:[#allocation3 + $0x150] sm:$0xff] %v1337
      %1343 = vst [vmem:[#allocation3 + $0x158] sm:$0xff] %v1339
      %v1344 = vld [vmem:[#allocation2 + $0x4] sm:$0xff]
      %v1345 = vld [vmem:[#allocation2 + $0xc] sm:$0xf]
      %v1346 = vld [vmem:[#allocation2 + $0x14] sm:$0xff]
      %v1347 = vld [vmem:[#allocation2 + $0x1c] sm:$0xf]
      %v1348 = vlaneseq
      %v1349 = vshrl.u32 %v1348, 7
      %v1350 = vsub.s32 3, %v1349
      %v1351 = vrot.slane %v1031, %v1350
      %v1352 = vlaneseq
      %v1353 = vshrl.u32 %v1352, 7
      %v1354 = vsub.s32 3, %v1353
      %v1355 = vrot.slane %v1038, %v1354
      %v1358 = vunpack.c.l.b16 %v1351
      %v1359 = vunpack.c.l.b16 %v1355
      %v1360 = vpack.c.b16 %v1359, %v1358
      %1361 = vrot.lane.b32.xlu0 %v1360, 64
      %v1362 = vpop.permute.xlu0 %1361
      %v1363 = vrot.slane %v1362, 4
      %v1364 = vsel %vm434, %v1363, %v1362
      %v1367 = vmul.bf16 %v1344, %v1364
      %v1368 = vmul.bf16 %v1345, %v1363
      %v1369 = vmul.bf16 %v1346, %v1364
      %v1370 = vmul.bf16 %v1347, %v1363
      %1375 = vrot.lane.b32.xlu0 %v1367, 64
      %v1376 = vpop.permute.xlu0 %1375
      %1377 = vrot.lane.b32.xlu0 %v1368, 64
      %v1378 = vpop.permute.xlu0 %1377
      %1379 = vrot.lane.b32.xlu0 %v1369, 64
      %v1380 = vpop.permute.xlu0 %1379
      %1381 = vrot.lane.b32.xlu0 %v1370, 64
      %v1382 = vpop.permute.xlu0 %1381
      %v1383 = vrot.slane %v1376, 4
      %v1384 = vrot.slane %v1378, 4
      %v1385 = vrot.slane %v1380, 4
      %v1386 = vrot.slane %v1382, 4
      %v1387 = vsel %vm239, %v1383, %v1384
      %v1388 = vsel %vm434, %v1376, %v1387
      %v1389 = vsel %vm239, %v1385, %v1386
      %v1390 = vsel %vm434, %v1380, %v1389
      %1393 = vst [vmem:[#allocation3 + $0x160] sm:$0xff] %v1388
      %1394 = vst [vmem:[#allocation3 + $0x168] sm:$0xff] %v1390
      %v1395 = vld [vmem:[#allocation2 + $0x4] sm:$0xff]
      %v1396 = vld [vmem:[#allocation2 + $0xc] sm:$0xf]
      %v1397 = vld [vmem:[#allocation2 + $0x14] sm:$0xff]
      %v1398 = vld [vmem:[#allocation2 + $0x1c] sm:$0xf]
      %v1399 = vlaneseq
      %v1400 = vshrl.u32 %v1399, 7
      %v1401 = vsub.s32 3, %v1400
      %v1402 = vrot.slane %v1088, %v1401
      %v1403 = vlaneseq
      %v1404 = vshrl.u32 %v1403, 7
      %v1405 = vsub.s32 3, %v1404
      %v1406 = vrot.slane %v1095, %v1405
      %v1409 = vunpack.c.l.b16 %v1402
      %v1410 = vunpack.c.l.b16 %v1406
      %v1411 = vpack.c.b16 %v1410, %v1409
      %1412 = vrot.lane.b32.xlu0 %v1411, 65
      %v1413 = vpop.permute.xlu0 %1412
      %v1414 = vrot.slane %v1413, 4
      %v1415 = vsel %vm406, %v1414, %v1413
      %v1418 = vmul.bf16 %v1395, %v1415
      %v1419 = vmul.bf16 %v1396, %v1414
      %v1420 = vmul.bf16 %v1397, %v1415
      %v1421 = vmul.bf16 %v1398, %v1414
      %1426 = vrot.lane.b32.xlu0 %v1418, 63
      %v1427 = vpop.permute.xlu0 %1426
      %1428 = vrot.lane.b32.xlu0 %v1419, 63
      %v1429 = vpop.permute.xlu0 %1428
      %1430 = vrot.lane.b32.xlu0 %v1420, 63
      %v1431 = vpop.permute.xlu0 %1430
      %1432 = vrot.lane.b32.xlu0 %v1421, 63
      %v1433 = vpop.permute.xlu0 %1432
      %v1434 = vrot.slane %v1427, 4
      %v1435 = vrot.slane %v1429, 4
      %v1436 = vrot.slane %v1431, 4
      %v1437 = vrot.slane %v1433, 4
      %v1438 = vsel %vm239, %v1434, %v1435
      %v1439 = vsel %vm381, %v1427, %v1438
      %v1440 = vsel %vm239, %v1436, %v1437
      %v1441 = vsel %vm381, %v1431, %v1440
      %1444 = vst [vmem:[#allocation3 + $0x170] sm:$0xff] %v1439
      %1445 = vst [vmem:[#allocation3 + $0x178] sm:$0xff] %v1441
      %v1446 = vld [vmem:[#allocation2 + $0x4] sm:$0xff]
      %v1447 = vld [vmem:[#allocation2 + $0xc] sm:$0xf]
      %v1448 = vld [vmem:[#allocation2 + $0x14] sm:$0xff]
      %v1449 = vld [vmem:[#allocation2 + $0x1c] sm:$0xf]
      %v1451 = vunpack.c.l.b16 %v183
      %v1452 = vunpack.c.h.b16 %v183
      %v1453 = vpack.c.b16 %v1451, %v1451
      %v1454 = vpack.c.b16 %v1452, %v1452
      %v1456 = vpack.i.b16 %v1453, %v1453
      %v1458 = vlaneseq
      %v1459 = vshrl.u32 %v1458, 7
      %v1460 = vsub.s32 0, %v1459
      %v1461 = vrot.slane %v1456, %v1460
      %v1463 = vpack.i.b16 %v1454, %v1454
      %v1465 = vlaneseq
      %v1466 = vshrl.u32 %v1465, 7
      %v1467 = vsub.s32 0, %v1466
      %v1468 = vrot.slane %v1463, %v1467
      %v1471 = vunpack.c.l.b16 %v1461
      %v1472 = vunpack.c.l.b16 %v1468
      %v1473 = vpack.c.b16 %v1472, %v1471
      %1474 = vrot.lane.b32.xlu0 %v1473, 71
      %v1475 = vpop.permute.xlu0 %1474
      %v1476 = vrot.slane %v1475, 4
      %v1477 = vsel %vm353, %v1476, %v1475
      %v1480 = vmul.bf16 %v1446, %v1477
      %v1481 = vmul.bf16 %v1447, %v1476
      %v1482 = vmul.bf16 %v1448, %v1477
      %v1483 = vmul.bf16 %v1449, %v1476
      %1488 = vrot.lane.b32.xlu0 %v1480, 57
      %v1489 = vpop.permute.xlu0 %1488
      %1490 = vrot.lane.b32.xlu0 %v1481, 57
      %v1491 = vpop.permute.xlu0 %1490
      %1492 = vrot.lane.b32.xlu0 %v1482, 57
      %v1493 = vpop.permute.xlu0 %1492
      %1494 = vrot.lane.b32.xlu0 %v1483, 57
      %v1495 = vpop.permute.xlu0 %1494
      %v1496 = vrot.slane %v1489, 4
      %v1497 = vrot.slane %v1491, 4
      %v1498 = vrot.slane %v1493, 4
      %v1499 = vrot.slane %v1495, 4
      %v1500 = vsel %vm239, %v1496, %v1497
      %v1501 = vsel %vm328, %v1489, %v1500
      %v1502 = vsel %vm239, %v1498, %v1499
      %v1503 = vsel %vm328, %v1493, %v1502
      %1506 = vst [vmem:[#allocation3 + $0x180] sm:$0xff] %v1501
      %1507 = vst [vmem:[#allocation3 + $0x188] sm:$0xff] %v1503
      %v1508 = vld [vmem:[#allocation2 + $0x4] sm:$0xff]
      %v1509 = vld [vmem:[#allocation2 + $0xc] sm:$0xf]
      %v1510 = vld [vmem:[#allocation2 + $0x14] sm:$0xff]
      %v1511 = vld [vmem:[#allocation2 + $0x1c] sm:$0xf]
      %v1512 = vshrl.u32 %v1453, 16
      %v1513 = vpack.i.b16 %v1512, %v1512
      %v1515 = vlaneseq
      %v1516 = vshrl.u32 %v1515, 7
      %v1517 = vsub.s32 0, %v1516
      %v1518 = vrot.slane %v1513, %v1517
      %v1519 = vshrl.u32 %v1454, 16
      %v1520 = vpack.i.b16 %v1519, %v1519
      %v1522 = vlaneseq
      %v1523 = vshrl.u32 %v1522, 7
      %v1524 = vsub.s32 0, %v1523
      %v1525 = vrot.slane %v1520, %v1524
      %v1528 = vunpack.c.l.b16 %v1518
      %v1529 = vunpack.c.l.b16 %v1525
      %v1530 = vpack.c.b16 %v1529, %v1528
      %1531 = vrot.lane.b32.xlu0 %v1530, 72
      %v1532 = vpop.permute.xlu0 %1531
      %v1533 = vrot.slane %v1532, 4
      %v1534 = vsel %vm300, %v1533, %v1532
      %v1537 = vmul.bf16 %v1508, %v1534
      %v1538 = vmul.bf16 %v1509, %v1533
      %v1539 = vmul.bf16 %v1510, %v1534
      %v1540 = vmul.bf16 %v1511, %v1533
      %1545 = vrot.lane.b32.xlu0 %v1537, 56
      %v1546 = vpop.permute.xlu0 %1545
      %1547 = vrot.lane.b32.xlu0 %v1538, 56
      %v1548 = vpop.permute.xlu0 %1547
      %1549 = vrot.lane.b32.xlu0 %v1539, 56
      %v1550 = vpop.permute.xlu0 %1549
      %1551 = vrot.lane.b32.xlu0 %v1540, 56
      %v1552 = vpop.permute.xlu0 %1551
      %v1553 = vrot.slane %v1546, 4
      %v1554 = vrot.slane %v1548, 4
      %v1555 = vrot.slane %v1550, 4
      %v1556 = vrot.slane %v1552, 4
      %v1557 = vsel %vm239, %v1553, %v1554
      %v1558 = vsel %vm275, %v1546, %v1557
      %v1559 = vsel %vm239, %v1555, %v1556
      %v1560 = vsel %vm275, %v1550, %v1559
      %1563 = vst [vmem:[#allocation3 + $0x190] sm:$0xff] %v1558
      %1564 = vst [vmem:[#allocation3 + $0x198] sm:$0xff] %v1560
      %v1565 = vld [vmem:[#allocation2 + $0x4] sm:$0xff]
      %v1566 = vld [vmem:[#allocation2 + $0xc] sm:$0xf]
      %v1567 = vld [vmem:[#allocation2 + $0x14] sm:$0xff]
      %v1568 = vld [vmem:[#allocation2 + $0x1c] sm:$0xf]
      %v1569 = vlaneseq
      %v1570 = vshrl.u32 %v1569, 7
      %v1571 = vsub.s32 1, %v1570
      %v1572 = vrot.slane %v1456, %v1571
      %v1573 = vlaneseq
      %v1574 = vshrl.u32 %v1573, 7
      %v1575 = vsub.s32 1, %v1574
      %v1576 = vrot.slane %v1463, %v1575
      %v1579 = vunpack.c.l.b16 %v1572
      %v1580 = vunpack.c.l.b16 %v1576
      %v1581 = vpack.c.b16 %v1580, %v1579
      %1582 = vrot.lane.b32.xlu0 %v1581, 73
      %v1583 = vpop.permute.xlu0 %1582
      %v1584 = vrot.slane %v1583, 4
      %v1585 = vsel %vm241, %v1584, %v1583
      %v1588 = vmul.bf16 %v1565, %v1585
      %v1589 = vmul.bf16 %v1566, %v1584
      %v1590 = vmul.bf16 %v1567, %v1585
      %v1591 = vmul.bf16 %v1568, %v1584
      %1596 = vrot.lane.b32.xlu0 %v1588, 55
      %v1597 = vpop.permute.xlu0 %1596
      %1598 = vrot.lane.b32.xlu0 %v1589, 55
      %v1599 = vpop.permute.xlu0 %1598
      %1600 = vrot.lane.b32.xlu0 %v1590, 55
      %v1601 = vpop.permute.xlu0 %1600
      %1602 = vrot.lane.b32.xlu0 %v1591, 55
      %v1603 = vpop.permute.xlu0 %1602
      %v1604 = vrot.slane %v1597, 4
      %v1605 = vrot.slane %v1599, 4
      %v1606 = vrot.slane %v1601, 4
      %v1607 = vrot.slane %v1603, 4
      %v1608 = vsel %vm239, %v1604, %v1605
      %v1609 = vsel %vm215, %v1597, %v1608
      %v1610 = vsel %vm239, %v1606, %v1607
      %v1611 = vsel %vm215, %v1601, %v1610
      %1614 = vst [vmem:[#allocation3 + $0x1a0] sm:$0xff] %v1609
      %1615 = vst [vmem:[#allocation3 + $0x1a8] sm:$0xff] %v1611
      %v1616 = vld [vmem:[%s1] sm:$0xff]
      %v1617 = vld [vmem:[%s1 + $0x8] sm:$0xff]
      %v1618 = vld [vmem:[#allocation3] sm:$0xff]
      %v1619 = vld [vmem:[#allocation3 + $0x8] sm:$0xff]
      %v1620 = vld [vmem:[#allocation3 + $0x10] sm:$0xff]
      %v1621 = vld [vmem:[#allocation3 + $0x18] sm:$0xff]
      %v1622 = vld [vmem:[#allocation3 + $0x20] sm:$0xff]
      %v1623 = vld [vmem:[#allocation3 + $0x28] sm:$0xff]
      %v1624 = vld [vmem:[#allocation3 + $0x30] sm:$0xff]
      %v1625 = vld [vmem:[#allocation3 + $0x38] sm:$0xff]
      %v1626 = vld [vmem:[#allocation3 + $0x40] sm:$0xff]
      %v1627 = vld [vmem:[#allocation3 + $0x48] sm:$0xff]
      %v1628 = vld [vmem:[#allocation3 + $0x50] sm:$0xff]
      %v1629 = vld [vmem:[#allocation3 + $0x58] sm:$0xff]
      %v1630 = vld [vmem:[#allocation3 + $0x60] sm:$0xff]
      %v1631 = vld [vmem:[#allocation3 + $0x68] sm:$0xff]
      %v1632 = vld [vmem:[#allocation3 + $0x70] sm:$0xff]
      %v1633 = vld [vmem:[#allocation3 + $0x78] sm:$0xff]
      %v1634 = vld [vmem:[#allocation3 + $0x80] sm:$0xff]
      %v1635 = vld [vmem:[#allocation3 + $0x88] sm:$0xff]
      %v1636 = vld [vmem:[#allocation3 + $0x90] sm:$0xff]
      %v1637 = vld [vmem:[#allocation3 + $0x98] sm:$0xff]
      %v1638 = vld [vmem:[#allocation3 + $0xa0] sm:$0xff]
      %v1639 = vld [vmem:[#allocation3 + $0xa8] sm:$0xff]
      %v1640 = vld [vmem:[#allocation3 + $0xb0] sm:$0xff]
      %v1641 = vld [vmem:[#allocation3 + $0xb8] sm:$0xff]
      %v1642 = vld [vmem:[#allocation3 + $0xc0] sm:$0xff]
      %v1643 = vld [vmem:[#allocation3 + $0xc8] sm:$0xff]
      %v1644 = vld [vmem:[#allocation3 + $0xd0] sm:$0xff]
      %v1645 = vld [vmem:[#allocation3 + $0xd8] sm:$0xff]
      %v1646 = vld [vmem:[#allocation3 + $0xe0] sm:$0xff]
      %v1647 = vld [vmem:[#allocation3 + $0xe8] sm:$0xff]
      %v1648 = vld [vmem:[#allocation3 + $0xf0] sm:$0xff]
      %v1649 = vld [vmem:[#allocation3 + $0xf8] sm:$0xff]
      %v1650 = vld [vmem:[#allocation3 + $0x100] sm:$0xff]
      %v1651 = vld [vmem:[#allocation3 + $0x108] sm:$0xff]
      %v1652 = vld [vmem:[#allocation3 + $0x110] sm:$0xff]
      %v1653 = vld [vmem:[#allocation3 + $0x118] sm:$0xff]
      %v1654 = vld [vmem:[#allocation3 + $0x120] sm:$0xff]
      %v1655 = vld [vmem:[#allocation3 + $0x128] sm:$0xff]
      %v1656 = vld [vmem:[#allocation3 + $0x130] sm:$0xff]
      %v1657 = vld [vmem:[#allocation3 + $0x138] sm:$0xff]
      %v1658 = vld [vmem:[#allocation3 + $0x140] sm:$0xff]
      %v1659 = vld [vmem:[#allocation3 + $0x148] sm:$0xff]
      %v1660 = vld [vmem:[#allocation3 + $0x150] sm:$0xff]
      %v1661 = vld [vmem:[#allocation3 + $0x158] sm:$0xff]
      %v1662 = vld [vmem:[#allocation3 + $0x160] sm:$0xff]
      %v1663 = vld [vmem:[#allocation3 + $0x168] sm:$0xff]
      %v1664 = vld [vmem:[#allocation3 + $0x170] sm:$0xff]
      %v1665 = vld [vmem:[#allocation3 + $0x178] sm:$0xff]
      %v1666 = vld [vmem:[#allocation3 + $0x180] sm:$0xff]
      %v1667 = vld [vmem:[#allocation3 + $0x188] sm:$0xff]
      %v1668 = vld [vmem:[#allocation3 + $0x190] sm:$0xff]
      %v1669 = vld [vmem:[#allocation3 + $0x198] sm:$0xff]
      %v1670 = vld [vmem:[#allocation3 + $0x1a0] sm:$0xff]
      %v1671 = vld [vmem:[#allocation3 + $0x1a8] sm:$0xff]
      %v1674 = vunpack.c.l.b16 %v1616
      %v1675 = vunpack.c.h.b16 %v1616
      %v1676 = vunpack.c.l.b16 %v1617
      %v1677 = vunpack.c.h.b16 %v1617
      %v1678 = vpack.c.b16 %v1674, %v1674
      %v1679 = vpack.c.b16 %v1675, %v1675
      %v1680 = vpack.c.b16 %v1676, %v1676
      %v1681 = vpack.c.b16 %v1677, %v1677
      %v1739 = vunpack.c.l.b16 %v1618
      %v1740 = vunpack.c.h.b16 %v1618
      %v1741 = vunpack.c.l.b16 %v1619
      %v1742 = vunpack.c.h.b16 %v1619
      %v1743 = vunpack.c.l.b16 %v1620
      %v1744 = vunpack.c.h.b16 %v1620
      %v1745 = vunpack.c.l.b16 %v1621
      %v1746 = vunpack.c.h.b16 %v1621
      %v1747 = vunpack.c.l.b16 %v1622
      %v1748 = vunpack.c.h.b16 %v1622
      %v1749 = vunpack.c.l.b16 %v1623
      %v1750 = vunpack.c.h.b16 %v1623
      %v1751 = vunpack.c.l.b16 %v1624
      %v1752 = vunpack.c.h.b16 %v1624
      %v1753 = vunpack.c.l.b16 %v1625
      %v1754 = vunpack.c.h.b16 %v1625
      %v1755 = vunpack.c.l.b16 %v1626
      %v1756 = vunpack.c.h.b16 %v1626
      %v1757 = vunpack.c.l.b16 %v1627
      %v1758 = vunpack.c.h.b16 %v1627
      %v1759 = vunpack.c.l.b16 %v1628
      %v1760 = vunpack.c.h.b16 %v1628
      %v1761 = vunpack.c.l.b16 %v1629
      %v1762 = vunpack.c.h.b16 %v1629
      %v1763 = vunpack.c.l.b16 %v1630
      %v1764 = vunpack.c.h.b16 %v1630
      %v1765 = vunpack.c.l.b16 %v1631
      %v1766 = vunpack.c.h.b16 %v1631
      %v1767 = vunpack.c.l.b16 %v1632
      %v1768 = vunpack.c.h.b16 %v1632
      %v1769 = vunpack.c.l.b16 %v1633
      %v1770 = vunpack.c.h.b16 %v1633
      %v1771 = vunpack.c.l.b16 %v1634
      %v1772 = vunpack.c.h.b16 %v1634
      %v1773 = vunpack.c.l.b16 %v1635
      %v1774 = vunpack.c.h.b16 %v1635
      %v1775 = vunpack.c.l.b16 %v1636
      %v1776 = vunpack.c.h.b16 %v1636
      %v1777 = vunpack.c.l.b16 %v1637
      %v1778 = vunpack.c.h.b16 %v1637
      %v1779 = vunpack.c.l.b16 %v1638
      %v1780 = vunpack.c.h.b16 %v1638
      %v1781 = vunpack.c.l.b16 %v1639
      %v1782 = vunpack.c.h.b16 %v1639
      %v1783 = vunpack.c.l.b16 %v1640
      %v1784 = vunpack.c.h.b16 %v1640
      %v1785 = vunpack.c.l.b16 %v1641
      %v1786 = vunpack.c.h.b16 %v1641
      %v1787 = vunpack.c.l.b16 %v1642
      %v1788 = vunpack.c.h.b16 %v1642
      %v1789 = vunpack.c.l.b16 %v1643
      %v1790 = vunpack.c.h.b16 %v1643
      %v1791 = vunpack.c.l.b16 %v1644
      %v1792 = vunpack.c.h.b16 %v1644
      %v1793 = vunpack.c.l.b16 %v1645
      %v1794 = vunpack.c.h.b16 %v1645
      %v1795 = vunpack.c.l.b16 %v1646
      %v1796 = vunpack.c.h.b16 %v1646
      %v1797 = vunpack.c.l.b16 %v1647
      %v1798 = vunpack.c.h.b16 %v1647
      %v1799 = vunpack.c.l.b16 %v1648
      %v1800 = vunpack.c.h.b16 %v1648
      %v1801 = vunpack.c.l.b16 %v1649
      %v1802 = vunpack.c.h.b16 %v1649
      %v1803 = vunpack.c.l.b16 %v1650
      %v1804 = vunpack.c.h.b16 %v1650
      %v1805 = vunpack.c.l.b16 %v1651
      %v1806 = vunpack.c.h.b16 %v1651
      %v1807 = vunpack.c.l.b16 %v1652
      %v1808 = vunpack.c.h.b16 %v1652
      %v1809 = vunpack.c.l.b16 %v1653
      %v1810 = vunpack.c.h.b16 %v1653
      %v1811 = vunpack.c.l.b16 %v1654
      %v1812 = vunpack.c.h.b16 %v1654
      %v1813 = vunpack.c.l.b16 %v1655
      %v1814 = vunpack.c.h.b16 %v1655
      %v1815 = vunpack.c.l.b16 %v1656
      %v1816 = vunpack.c.h.b16 %v1656
      %v1817 = vunpack.c.l.b16 %v1657
      %v1818 = vunpack.c.h.b16 %v1657
      %v1819 = vunpack.c.l.b16 %v1658
      %v1820 = vunpack.c.h.b16 %v1658
      %v1821 = vunpack.c.l.b16 %v1659
      %v1822 = vunpack.c.h.b16 %v1659
      %v1823 = vunpack.c.l.b16 %v1660
      %v1824 = vunpack.c.h.b16 %v1660
      %v1825 = vunpack.c.l.b16 %v1661
      %v1826 = vunpack.c.h.b16 %v1661
      %v1827 = vunpack.c.l.b16 %v1662
      %v1828 = vunpack.c.h.b16 %v1662
      %v1829 = vunpack.c.l.b16 %v1663
      %v1830 = vunpack.c.h.b16 %v1663
      %v1831 = vunpack.c.l.b16 %v1664
      %v1832 = vunpack.c.h.b16 %v1664
      %v1833 = vunpack.c.l.b16 %v1665
      %v1834 = vunpack.c.h.b16 %v1665
      %v1835 = vunpack.c.l.b16 %v1666
      %v1836 = vunpack.c.h.b16 %v1666
      %v1837 = vunpack.c.l.b16 %v1667
      %v1838 = vunpack.c.h.b16 %v1667
      %v1839 = vunpack.c.l.b16 %v1668
      %v1840 = vunpack.c.h.b16 %v1668
      %v1841 = vunpack.c.l.b16 %v1669
      %v1842 = vunpack.c.h.b16 %v1669
      %v1843 = vunpack.c.l.b16 %v1670
      %v1844 = vunpack.c.h.b16 %v1670
      %v1845 = vunpack.c.l.b16 %v1671
      %v1846 = vunpack.c.h.b16 %v1671
      %v1847 = vpack.c.b16 %v1741, %v1739
      %v1848 = vpack.c.b16 %v1742, %v1740
      %v1849 = vpack.c.b16 %v1745, %v1743
      %v1850 = vpack.c.b16 %v1746, %v1744
      %v1851 = vpack.c.b16 %v1749, %v1747
      %v1852 = vpack.c.b16 %v1750, %v1748
      %v1853 = vpack.c.b16 %v1753, %v1751
      %v1854 = vpack.c.b16 %v1754, %v1752
      %v1855 = vpack.c.b16 %v1757, %v1755
      %v1856 = vpack.c.b16 %v1758, %v1756
      %v1857 = vpack.c.b16 %v1761, %v1759
      %v1858 = vpack.c.b16 %v1762, %v1760
      %v1859 = vpack.c.b16 %v1765, %v1763
      %v1860 = vpack.c.b16 %v1766, %v1764
      %v1861 = vpack.c.b16 %v1769, %v1767
      %v1862 = vpack.c.b16 %v1770, %v1768
      %v1863 = vpack.c.b16 %v1773, %v1771
      %v1864 = vpack.c.b16 %v1774, %v1772
      %v1865 = vpack.c.b16 %v1777, %v1775
      %v1866 = vpack.c.b16 %v1778, %v1776
      %v1867 = vpack.c.b16 %v1781, %v1779
      %v1868 = vpack.c.b16 %v1782, %v1780
      %v1869 = vpack.c.b16 %v1785, %v1783
      %v1870 = vpack.c.b16 %v1786, %v1784
      %v1871 = vpack.c.b16 %v1789, %v1787
      %v1872 = vpack.c.b16 %v1790, %v1788
      %v1873 = vpack.c.b16 %v1793, %v1791
      %v1874 = vpack.c.b16 %v1794, %v1792
      %v1875 = vpack.c.b16 %v1797, %v1795
      %v1876 = vpack.c.b16 %v1798, %v1796
      %v1877 = vpack.c.b16 %v1801, %v1799
      %v1878 = vpack.c.b16 %v1802, %v1800
      %v1879 = vpack.c.b16 %v1805, %v1803
      %v1880 = vpack.c.b16 %v1806, %v1804
      %v1881 = vpack.c.b16 %v1809, %v1807
      %v1882 = vpack.c.b16 %v1810, %v1808
      %v1883 = vpack.c.b16 %v1813, %v1811
      %v1884 = vpack.c.b16 %v1814, %v1812
      %v1885 = vpack.c.b16 %v1817, %v1815
      %v1886 = vpack.c.b16 %v1818, %v1816
      %v1887 = vpack.c.b16 %v1821, %v1819
      %v1888 = vpack.c.b16 %v1822, %v1820
      %v1889 = vpack.c.b16 %v1825, %v1823
      %v1890 = vpack.c.b16 %v1826, %v1824
      %v1891 = vpack.c.b16 %v1829, %v1827
      %v1892 = vpack.c.b16 %v1830, %v1828
      %v1893 = vpack.c.b16 %v1833, %v1831
      %v1894 = vpack.c.b16 %v1834, %v1832
      %v1895 = vpack.c.b16 %v1837, %v1835
      %v1896 = vpack.c.b16 %v1838, %v1836
      %v1897 = vpack.c.b16 %v1841, %v1839
      %v1898 = vpack.c.b16 %v1842, %v1840
      %v1899 = vpack.c.b16 %v1845, %v1843
      %v1900 = vpack.c.b16 %v1846, %v1844
      %vm1955 = vcmask 392192
      %v1957 = vsel %vm1955, %v1681, 0
      %1959 = vmatprep.subr.bf16.mxu0 %v1862
      %1960 = vmatpush1.bf16.msra.mxu0 %v1861
      %1961 = vmatprep.subr.bf16.mxu0 %v1860
      %1962 = vmatpush1.bf16.msra.mxu0 %v1859
      %1963 = vmatprep.subr.bf16.mxu0 %v1858
      %1964 = vmatpush1.bf16.msra.mxu0 %v1857
      %1965 = vmatprep.subr.bf16.mxu0 %v1856
      %1966 = vmatpush1.bf16.msra.mxu0 %v1855
      %1967 = vmatprep.subr.bf16.mxu0 %v1854
      %1968 = vmatpush1.bf16.msra.mxu0 %v1853
      %1969 = vmatprep.subr.bf16.mxu0 %v1852
      %1970 = vmatpush1.bf16.msra.mxu0 %v1851
      %1971 = vmatprep.subr.bf16.mxu0 %v1850
      %1972 = vmatpush1.bf16.msra.mxu0 %v1849
      %1973 = vmatprep.subr.bf16.mxu0 %v1848
      %1974 = vmatpush1.bf16.msra.mxu0 %v1847
      %1975 = vmatprep.subr.bf16.mxu0 %v1878
      %1976 = vmatpush2.bf16.msra.mxu0 %v1877
      %1977 = vmatprep.subr.bf16.mxu0 %v1876
      %1978 = vmatpush2.bf16.msra.mxu0 %v1875
      %1979 = vmatprep.subr.bf16.mxu0 %v1874
      %1980 = vmatpush2.bf16.msra.mxu0 %v1873
      %1981 = vmatprep.subr.bf16.mxu0 %v1872
      %1982 = vmatpush2.bf16.msra.mxu0 %v1871
      %1983 = vmatprep.subr.bf16.mxu0 %v1870
      %1984 = vmatpush2.bf16.msra.mxu0 %v1869
      %1985 = vmatprep.subr.bf16.mxu0 %v1868
      %1986 = vmatpush2.bf16.msra.mxu0 %v1867
      %1987 = vmatprep.subr.bf16.mxu0 %v1866
      %1988 = vmatpush2.bf16.msra.mxu0 %v1865
      %1989 = vmatprep.subr.bf16.mxu0 %v1864
      %1990 = vmatpush2.bf16.msra.mxu0 %v1863
      %1991 = vmatprep.mubr.bf16.mxu0 %v1679
      %1992 = vmatmul.mubr.bf16.gmra.mxu0 %v1678
      %v1993 = vpop.f32.mrf.mxu0
      %v1994 = vadd.f32 0.0, %v1993
      %v1995 = vpop.f32.mrf.mxu0
      %v1996 = vadd.f32 0.0, %v1995
      %v1997 = vpop.f32.mrf.mxu0
      %v1998 = vpop.f32.mrf.mxu0
      %1999 = vdwg.mxu0
      %2000 = vmatprep.subr.bf16.mxu0 %v1894
      %2001 = vmatpush1.bf16.msra.mxu0 %v1893
      %2002 = vmatprep.subr.bf16.mxu0 %v1892
      %2003 = vmatpush1.bf16.msra.mxu0 %v1891
      %2004 = vmatprep.subr.bf16.mxu0 %v1890
      %2005 = vmatpush1.bf16.msra.mxu0 %v1889
      %2006 = vmatprep.subr.bf16.mxu0 %v1888
      %2007 = vmatpush1.bf16.msra.mxu0 %v1887
      %2008 = vmatprep.subr.bf16.mxu0 %v1886
      %2009 = vmatpush1.bf16.msra.mxu0 %v1885
      %2010 = vmatprep.subr.bf16.mxu0 %v1884
      %2011 = vmatpush1.bf16.msra.mxu0 %v1883
      %2012 = vmatprep.subr.bf16.mxu0 %v1882
      %2013 = vmatpush1.bf16.msra.mxu0 %v1881
      %2014 = vmatprep.subr.bf16.mxu0 %v1880
      %2015 = vmatpush1.bf16.msra.mxu0 %v1879
      %2016 = vmatprep.subr.bf16.mxu0 0
      %2017 = vmatpush2.bf16.msra.mxu0 0
      %2018 = vmatprep.subr.bf16.mxu0 0
      %2019 = vmatpush2.bf16.msra.mxu0 0
      %2020 = vmatprep.subr.bf16.mxu0 0
      %2021 = vmatpush2.bf16.msra.mxu0 0
      %2022 = vmatprep.subr.bf16.mxu0 0
      %2023 = vmatpush2.bf16.msra.mxu0 0
      %2024 = vmatprep.subr.bf16.mxu0 0
      %2025 = vmatpush2.bf16.msra.mxu0 0
      %2026 = vmatprep.subr.bf16.mxu0 %v1900
      %2027 = vmatpush2.bf16.msra.mxu0 %v1899
      %2028 = vmatprep.subr.bf16.mxu0 %v1898
      %2029 = vmatpush2.bf16.msra.mxu0 %v1897
      %2030 = vmatprep.subr.bf16.mxu0 %v1896
      %2031 = vmatpush2.bf16.msra.mxu0 %v1895
      %2032 = vmatprep.mubr.bf16.mxu0 %v1957
      %2033 = vmatmul.mubr.bf16.gmra.mxu0 %v1680
      %v2034 = vpop.f32.mrf.mxu0
      %v2035 = vadd.f32 %v1994, %v2034
      %v2036 = vpop.f32.mrf.mxu0
      %v2037 = vadd.f32 %v1996, %v2036
      %v2038 = vpop.f32.mrf.mxu0
      %v2039 = vpop.f32.mrf.mxu0
      %2040 = vdwg.mxu0
      %2041 = vst [vmem:[%s170] sm:$0xff] %v2035
      %2042 = vst [vmem:[%s170 + $0x8] sm:$0xff] %v2037
      %p2043 = scmp.lt.s32.totalorder %s14, 1
      %s2044 = scalar_select %p2043, %s14, 1
      %s2045 = smul.addr %s2044, 2
      %s2046 = smul.addr %s2045, 8
      %s2047 = scalar_lea.vmem %s3, %s2046
      // Predicated region
      $region33: #{head_conv_forward.3} parent=31 // pred_check
        %p2048 = pneg %p100
      $region34: #{head_conv_forward.3} parent=31 // pred_check_branch
        %2050 = sbr.rel (%p2048) target = $region36
      $region35: #{head_conv_forward.3} parent=31 // pred_region
        _
      $region36: #{head_conv_forward.3} parent=31 // pred_fallthru
        _
    $region32: #{head_conv_forward.3} parent=5 // pred_fallthru
      _
    %p2051 = scmp.le.s32.totalorder 2, %s9
    // Predicated region
    $region37: #{head_conv_forward.3} parent=5 // pred_check
      %p2052 = pneg %p2051
    $region38: #{head_conv_forward.3} parent=5 // pred_check_branch
      %2054 = sbr.rel (%p2052) target = $region40
    $region39: #{head_conv_forward.3} parent=5 // pred_region
      %s2055 = ssub.s32 %s9, 2
      // Predicated region
      $region41: #{head_conv_forward.3} parent=39 // pred_check
        %p2056 = pneg %p106
      $region42: #{head_conv_forward.3} parent=39 // pred_check_branch
        %2058 = sbr.rel (%p2056) target = $region44
      $region43: #{head_conv_forward.3} parent=39 // pred_region
        %p2059 = scmp.lt.s32.totalorder %s15, 1
        %s2060 = scalar_select %p2059, %s15, 1
        %s2061 = smul.addr %s2060, 2
        %s2062 = smul.addr %s2061, 8
        %s2063 = scalar_lea.vmem %s3, %s2062
      $region44: #{head_conv_forward.3} parent=39 // pred_fallthru
        _
    $region40: #{head_conv_forward.3} parent=5 // pred_fallthru
      _
  $region6: #{head_conv_forward.3} parent=0 // loop_footer
    %s13 = sadd.s32 1, %s9
  $region7: #{head_conv_forward.3} parent=0 // loop_footer_branch
    %8 = sbr.rel target = $region3
  $region8: #{head_conv_forward.3} parent=0 // loop_exit
    _

</llo_original>
